<compile_context>
chip_gen: v6e
topology: v6e:2x2x1
jax: 0.10.0
libtpu: 0.0.40
codegen_flags: <defaults>
</compile_context>

<pallas_src>
import functools
import math

import jax
import jax.numpy as jnp
from jax.experimental import pallas as pl
from jax.experimental.pallas import tpu as pltpu

_NEG_INF = -1e30
_LN_EPS = 1e-5


def _cross_attn_kernel(hq_ref, hkv_ref, mask_ref, w_ref, b_ref, out_ref, *, n_head):
    B, L, D = hq_ref.shape
    S = hkv_ref.shape[1]
    H = n_head
    hd = D // H
    BL = B * L
    BS = B * S
    scale = 1.0 / math.sqrt(hd)

    # Fold batch into rows (layout-preserving reshapes: L, S are multiples of 8).
    hq = hq_ref[...].reshape(BL, D)          # (BL, D)
    hkv = hkv_ref[...].reshape(BS, D)        # (BS, D)

    b = b_ref[...]                           # (6, D): bq, bk, bv, bo, gamma, beta
    bq, bk, bv = b[0:1], b[1:2], b[2:3]
    bo, gamma, beta = b[3:4], b[4:5], b[5:6]

    # Input projections (one MXU launch each, batch folded into rows).
    q = (jnp.dot(hq, w_ref[0], preferred_element_type=jnp.float32) + bq) * scale
    k = jnp.dot(hkv, w_ref[1], preferred_element_type=jnp.float32) + bk
    v = jnp.dot(hkv, w_ref[2], preferred_element_type=jnp.float32) + bv

    # Head-stacked operands: rows [h*BL, (h+1)*BL) of q_stk hold q with every lane
    # outside head h zeroed, so  q_stk @ k^T  yields ALL heads' scores in a single
    # matmul ((q ⊙ head_mask_h) · k == q_h · k_h).  Same idea for v.
    lane_q = jax.lax.broadcasted_iota(jnp.int32, (BL, D), 1)
    lane_v = jax.lax.broadcasted_iota(jnp.int32, (BS, D), 1)
    q_stk = jnp.concatenate(
        [jnp.where((lane_q >= h * hd) & (lane_q < (h + 1) * hd), q, 0.0) for h in range(H)],
        axis=0)                              # (H*BL, D)
    v_stk = jnp.concatenate(
        [jnp.where((lane_v >= h * hd) & (lane_v < (h + 1) * hd), v, 0.0) for h in range(H)],
        axis=0)                              # (H*BS, D)

    # (v ⊙ head_h) @ Wo^T for every head in one launch:
    # rows [h*BS, (h+1)*BS) hold v_h @ Wo_h^T, so no lane-axis concat is ever needed.
    vo = jnp.dot(v_stk, w_ref[3], preferred_element_type=jnp.float32)    # (H*BS, D)

    # Scores for all heads / both batches at once: (H*BL, BS).
    s = jax.lax.dot_general(q_stk, k, (((1,), (1,)), ((), ())),
                            preferred_element_type=jnp.float32)

    # Additive attention mask built in-kernel: block-diagonal over the folded batch,
    # causal within each L-wide tile of the concatenated kv sequence (== torch buffer
    # triu(k=1) tiled S//L times).  Pure iota/compare work, no division.
    r = jax.lax.broadcasted_iota(jnp.int32, (BL, BS), 0)
    c = jax.lax.broadcasted_iota(jnp.int32, (BL, BS), 1)
    blocks = []
    for bi in range(B):
        for t in range(S // L):
            c0 = bi * S + t * L
            blocks.append((r >= bi * L) & (r < (bi + 1) * L)
                          & (c >= c0) & (c < c0 + L)
                          & ((c - c0) <= (r - bi * L)))
    allowed = blocks[0]
    for blk in blocks[1:]:
        allowed = jnp.logical_or(allowed, blk)
    bias = jnp.where(allowed, 0.0, _NEG_INF).astype(jnp.float32)         # (BL, BS)
    s = s + jnp.concatenate([bias] * H, axis=0)                          # (H*BL, BS)

    # Row-wise softmax (every row keeps >= 1 unmasked key -> NaN-free).
    s = s - jnp.max(s, axis=-1, keepdims=True)
    p = jnp.exp(s)
    p = p * pl.reciprocal(jnp.sum(p, axis=-1, keepdims=True), approx=True)

    # Attention output (already Wo-projected), accumulated over heads on the MXU.
    attn = jnp.dot(p[0:BL], vo[0:BS], preferred_element_type=jnp.float32)
    for h in range(1, H):
        attn = attn + jnp.dot(p[h * BL:(h + 1) * BL], vo[h * BS:(h + 1) * BS],
                              preferred_element_type=jnp.float32)
    attn = attn + bo

    # TODO(synk): nn.Dropout is stochastic in training; implemented as eval-mode identity.
    x = hq + attn

    # LayerNorm (eps=1e-5, biased variance) + affine, then the output gating mask.
    mu = jnp.mean(x, axis=-1, keepdims=True)
    xc = x - mu
    var = jnp.mean(xc * xc, axis=-1, keepdims=True)
    y = xc * jax.lax.rsqrt(var + _LN_EPS) * gamma + beta
    y = y * mask_ref[...].reshape(BL, 1)

    out_ref[...] = y.reshape(B, L, D).astype(out_ref.dtype)


def cross_attention2(h_q, h_kv1, h_kv2, mask, params, *, n_head):
    B, L, D = h_q.shape
    h_kv = jnp.concatenate([h_kv1, h_kv2], axis=1)       # concat along the seq dim
    S = h_kv.shape[1]
    assert S % L == 0, "concatenated kv length must be a multiple of len_trim"
    assert D % n_head == 0

    # Fused parameter tensors (2 inputs instead of 10 tiny weight/bias tensors).
    w_all = jnp.stack([params["wq"].T, params["wk"].T,
                       params["wv"].T, params["wo"].T])                   # (4, D, D)
    b_all = jnp.stack([params["bq"], params["bk"], params["bv"],
                       params["bo"], params["gamma"], params["beta"]])    # (6, D)

    return pl.pallas_call(
        functools.partial(_cross_attn_kernel, n_head=n_head),
        out_shape=jax.ShapeDtypeStruct((B, L, D), h_q.dtype),
        # Single invocation, no grid: everything (~25 KB) lives in VMEM, so we pay
        # zero per-grid-step overhead and issue only 6 input DMAs total.
        in_specs=[pl.BlockSpec(memory_space=pltpu.MemorySpace.VMEM)] * 5,
        out_specs=pl.BlockSpec(memory_space=pltpu.MemorySpace.VMEM),
    )(h_q, h_kv, mask, w_all, b_all)


def reference(h_q, h_kv1, h_kv2, mask, params, *, n_head):
    """Pure-JAX reference matching torch.nn.MultiheadAttention semantics."""
    h_kv = jnp.concatenate([h_kv1, h_kv2], axis=1)
    B, L, D = h_q.shape
    S = h_kv.shape[1]
    hd = D // n_head
    q = h_q @ params["wq"].T + params["bq"]
    k = h_kv @ params["wk"].T + params["bk"]
    v = h_kv @ params["wv"].T + params["bv"]
    q = q.reshape(B, L, n_head, hd).transpose(0, 2, 1, 3)
    k = k.reshape(B, S, n_head, hd).transpose(0, 2, 1, 3)
    v = v.reshape(B, S, n_head, hd).transpose(0, 2, 1, 3)
    tri = jnp.triu(jnp.ones((L, L), dtype=bool), k=1)
    bias = jnp.where(jnp.concatenate([tri] * (S // L), axis=-1), -1e30, 0.0)
    s = jnp.einsum("bhld,bhsd->bhls", q, k) / jnp.sqrt(hd) + bias
    a = jax.nn.softmax(s, axis=-1)
    o = jnp.einsum("bhls,bhsd->bhld", a, v).transpose(0, 2, 1, 3).reshape(B, L, D)
    o = o @ params["wo"].T + params["bo"]
    x = h_q + o
    mu = x.mean(-1, keepdims=True)
    var = ((x - mu) ** 2).mean(-1, keepdims=True)
    y = (x - mu) / jnp.sqrt(var + 1e-5) * params["gamma"] + params["beta"]
    return y * mask


if __name__ == "__main__":
    B, d_embed, n_head, len_trim = 2, 32, 4, 8
    L = len_trim
    S1, S2 = len_trim, 2 * len_trim          # total kv length = 3 * len_trim

    key = jax.random.PRNGKey(0)
    ks = jax.random.split(key, 12)

    h_q = jax.random.normal(ks[0], (B, L, d_embed), jnp.float32)
    h_kv1 = jax.random.normal(ks[1], (B, S1, d_embed), jnp.float32)
    h_kv2 = jax.random.normal(ks[2], (B, S2, d_embed), jnp.float32)
    mask = (jax.random.uniform(ks[3], (B, L, 1)) > 0.2).astype(jnp.float32)

    scale = 0.05
    params = {
        "wq": scale * jax.random.normal(ks[4], (d_embed, d_embed), jnp.float32),
        "wk": scale * jax.random.normal(ks[5], (d_embed, d_embed), jnp.float32),
        "wv": scale * jax.random.normal(ks[6], (d_embed, d_embed), jnp.float32),
        "bq": scale * jax.random.normal(ks[7], (d_embed,), jnp.float32),
        "bk": scale * jax.random.normal(ks[8], (d_embed,), jnp.float32),
        "bv": scale * jax.random.normal(ks[9], (d_embed,), jnp.float32),
        "wo": scale * jax.random.normal(ks[10], (d_embed, d_embed), jnp.float32),
        "bo": scale * jax.random.normal(ks[11], (d_embed,), jnp.float32),
        "gamma": jnp.ones((d_embed,), jnp.float32),
        "beta": jnp.zeros((d_embed,), jnp.float32),
    }

    out = cross_attention2(h_q, h_kv1, h_kv2, mask, params, n_head=n_head)
    out = jax.block_until_ready(out)

    ref = reference(h_q, h_kv1, h_kv2, mask, params, n_head=n_head)
    assert out.shape == (B, L, d_embed)
    # Tolerance leaves headroom for the EUP approximate-reciprocal softmax denominator.
    assert jnp.allclose(out, ref, atol=2e-4, rtol=2e-4), "mismatch vs reference"
    print("KERNEL_OK")
</pallas_src>

<mosaic_0001>
module attributes {stable_mosaic.version = 11 : i64} {
  func.func @_cross_attn_kernel(%arg0: memref<2x8x32xf32, #tpu.memory_space<vmem>>, %arg1: memref<2x24x32xf32, #tpu.memory_space<vmem>>, %arg2: memref<2x8x1xf32, #tpu.memory_space<vmem>>, %arg3: memref<4x32x32xf32, #tpu.memory_space<vmem>>, %arg4: memref<6x32xf32, #tpu.memory_space<vmem>>, %arg5: memref<2x8x32xf32, #tpu.memory_space<vmem>>) attributes {dimension_semantics = [], scalar_prefetch = 0 : i64, scratch_operands = 0 : i64, tpu.core_type = #tpu.core_type<tc>} {
    %c0 = arith.constant 0 : index
    %c0_0 = arith.constant 0 : index
    %c0_1 = arith.constant 0 : index
    %0 = vector.load %arg0[%c0, %c0_0, %c0_1] : memref<2x8x32xf32, #tpu.memory_space<vmem>>, vector<2x8x32xf32>
    %1 = vector.shape_cast %0 : vector<2x8x32xf32> to vector<16x32xf32>
    %c0_2 = arith.constant 0 : index
    %c0_3 = arith.constant 0 : index
    %c0_4 = arith.constant 0 : index
    %2 = vector.load %arg1[%c0_2, %c0_3, %c0_4] : memref<2x24x32xf32, #tpu.memory_space<vmem>>, vector<2x24x32xf32>
    %3 = vector.shape_cast %2 : vector<2x24x32xf32> to vector<48x32xf32>
    %c0_5 = arith.constant 0 : index
    %c0_6 = arith.constant 0 : index
    %4 = vector.load %arg4[%c0_5, %c0_6] : memref<6x32xf32, #tpu.memory_space<vmem>>, vector<6x32xf32>
    %5 = vector.extract_strided_slice %4 {offsets = [0, 0], sizes = [1, 32], strides = [1, 1]} : vector<6x32xf32> to vector<1x32xf32>
    %6 = vector.extract_strided_slice %4 {offsets = [1, 0], sizes = [1, 32], strides = [1, 1]} : vector<6x32xf32> to vector<1x32xf32>
    %7 = vector.extract_strided_slice %4 {offsets = [2, 0], sizes = [1, 32], strides = [1, 1]} : vector<6x32xf32> to vector<1x32xf32>
    %8 = vector.extract_strided_slice %4 {offsets = [3, 0], sizes = [1, 32], strides = [1, 1]} : vector<6x32xf32> to vector<1x32xf32>
    %9 = vector.extract_strided_slice %4 {offsets = [4, 0], sizes = [1, 32], strides = [1, 1]} : vector<6x32xf32> to vector<1x32xf32>
    %10 = vector.extract_strided_slice %4 {offsets = [5, 0], sizes = [1, 32], strides = [1, 1]} : vector<6x32xf32> to vector<1x32xf32>
    %c0_7 = arith.constant 0 : index
    %c0_8 = arith.constant 0 : index
    %c0_9 = arith.constant 0 : index
    %11 = vector.load %arg3[%c0_7, %c0_8, %c0_9] : memref<4x32x32xf32, #tpu.memory_space<vmem>>, vector<1x32x32xf32>
    %12 = vector.shape_cast %11 : vector<1x32x32xf32> to vector<32x32xf32>
    %cst = arith.constant dense<0.000000e+00> : vector<16x32xf32>
    %13 = tpu.matmul %1, %12, %cst {dimension_numbers = #tpu.dot_dimension_numbers<[1], [0], [0], [1], [0, 0, 1, 1], [], []>} : vector<16x32xf32>, vector<32x32xf32>, vector<16x32xf32> -> vector<16x32xf32>
    %14 = vector.broadcast %5 : vector<1x32xf32> to vector<16x32xf32>
    %15 = arith.addf %13, %14 : vector<16x32xf32>
    %cst_10 = arith.constant 0.353553385 : f32
    %16 = vector.broadcast %cst_10 : f32 to vector<16x32xf32>
    %17 = arith.mulf %15, %16 : vector<16x32xf32>
    %c1 = arith.constant 1 : index
    %c0_11 = arith.constant 0 : index
    %c0_12 = arith.constant 0 : index
    %18 = vector.load %arg3[%c1, %c0_11, %c0_12] : memref<4x32x32xf32, #tpu.memory_space<vmem>>, vector<1x32x32xf32>
    %19 = vector.shape_cast %18 : vector<1x32x32xf32> to vector<32x32xf32>
    %cst_13 = arith.constant dense<0.000000e+00> : vector<48x32xf32>
    %20 = tpu.matmul %3, %19, %cst_13 {dimension_numbers = #tpu.dot_dimension_numbers<[1], [0], [0], [1], [0, 0, 1, 1], [], []>} : vector<48x32xf32>, vector<32x32xf32>, vector<48x32xf32> -> vector<48x32xf32>
    %21 = vector.broadcast %6 : vector<1x32xf32> to vector<48x32xf32>
    %22 = arith.addf %20, %21 : vector<48x32xf32>
    %c2 = arith.constant 2 : index
    %c0_14 = arith.constant 0 : index
    %c0_15 = arith.constant 0 : index
    %23 = vector.load %arg3[%c2, %c0_14, %c0_15] : memref<4x32x32xf32, #tpu.memory_space<vmem>>, vector<1x32x32xf32>
    %24 = vector.shape_cast %23 : vector<1x32x32xf32> to vector<32x32xf32>
    %cst_16 = arith.constant dense<0.000000e+00> : vector<48x32xf32>
    %25 = tpu.matmul %3, %24, %cst_16 {dimension_numbers = #tpu.dot_dimension_numbers<[1], [0], [0], [1], [0, 0, 1, 1], [], []>} : vector<48x32xf32>, vector<32x32xf32>, vector<48x32xf32> -> vector<48x32xf32>
    %26 = vector.broadcast %7 : vector<1x32xf32> to vector<48x32xf32>
    %27 = arith.addf %25, %26 : vector<48x32xf32>
    %28 = tpu.iota {dimensions = array<i32: 1>} : vector<16x32xi32>
    %29 = tpu.iota {dimensions = array<i32: 1>} : vector<48x32xi32>
    %c0_i32 = arith.constant 0 : i32
    %30 = vector.broadcast %c0_i32 : i32 to vector<16x32xi32>
    %31 = arith.cmpi sge, %28, %30 : vector<16x32xi32>
    %c8_i32 = arith.constant 8 : i32
    %32 = vector.broadcast %c8_i32 : i32 to vector<16x32xi32>
    %33 = arith.cmpi slt, %28, %32 : vector<16x32xi32>
    %34 = arith.andi %31, %33 : vector<16x32xi1>
    %cst_17 = arith.constant 0.000000e+00 : f32
    %35 = vector.broadcast %cst_17 : f32 to vector<16x32xf32>
    %36 = arith.select %34, %17, %35 : vector<16x32xi1>, vector<16x32xf32>
    %c8_i32_18 = arith.constant 8 : i32
    %37 = vector.broadcast %c8_i32_18 : i32 to vector<16x32xi32>
    %38 = arith.cmpi sge, %28, %37 : vector<16x32xi32>
    %c16_i32 = arith.constant 16 : i32
    %39 = vector.broadcast %c16_i32 : i32 to vector<16x32xi32>
    %40 = arith.cmpi slt, %28, %39 : vector<16x32xi32>
    %41 = arith.andi %38, %40 : vector<16x32xi1>
    %cst_19 = arith.constant 0.000000e+00 : f32
    %42 = vector.broadcast %cst_19 : f32 to vector<16x32xf32>
    %43 = arith.select %41, %17, %42 : vector<16x32xi1>, vector<16x32xf32>
    %c16_i32_20 = arith.constant 16 : i32
    %44 = vector.broadcast %c16_i32_20 : i32 to vector<16x32xi32>
    %45 = arith.cmpi sge, %28, %44 : vector<16x32xi32>
    %c24_i32 = arith.constant 24 : i32
    %46 = vector.broadcast %c24_i32 : i32 to vector<16x32xi32>
    %47 = arith.cmpi slt, %28, %46 : vector<16x32xi32>
    %48 = arith.andi %45, %47 : vector<16x32xi1>
    %cst_21 = arith.constant 0.000000e+00 : f32
    %49 = vector.broadcast %cst_21 : f32 to vector<16x32xf32>
    %50 = arith.select %48, %17, %49 : vector<16x32xi1>, vector<16x32xf32>
    %c24_i32_22 = arith.constant 24 : i32
    %51 = vector.broadcast %c24_i32_22 : i32 to vector<16x32xi32>
    %52 = arith.cmpi sge, %28, %51 : vector<16x32xi32>
    %c32_i32 = arith.constant 32 : i32
    %53 = vector.broadcast %c32_i32 : i32 to vector<16x32xi32>
    %54 = arith.cmpi slt, %28, %53 : vector<16x32xi32>
    %55 = arith.andi %52, %54 : vector<16x32xi1>
    %cst_23 = arith.constant 0.000000e+00 : f32
    %56 = vector.broadcast %cst_23 : f32 to vector<16x32xf32>
    %57 = arith.select %55, %17, %56 : vector<16x32xi1>, vector<16x32xf32>
    %58 = tpu.concatenate %36, %43, %50, %57 in 0 : vector<16x32xf32>, vector<16x32xf32>, vector<16x32xf32>, vector<16x32xf32> -> vector<64x32xf32>
    %c0_i32_24 = arith.constant 0 : i32
    %59 = vector.broadcast %c0_i32_24 : i32 to vector<48x32xi32>
    %60 = arith.cmpi sge, %29, %59 : vector<48x32xi32>
    %c8_i32_25 = arith.constant 8 : i32
    %61 = vector.broadcast %c8_i32_25 : i32 to vector<48x32xi32>
    %62 = arith.cmpi slt, %29, %61 : vector<48x32xi32>
    %63 = arith.andi %60, %62 : vector<48x32xi1>
    %cst_26 = arith.constant 0.000000e+00 : f32
    %64 = vector.broadcast %cst_26 : f32 to vector<48x32xf32>
    %65 = arith.select %63, %27, %64 : vector<48x32xi1>, vector<48x32xf32>
    %c8_i32_27 = arith.constant 8 : i32
    %66 = vector.broadcast %c8_i32_27 : i32 to vector<48x32xi32>
    %67 = arith.cmpi sge, %29, %66 : vector<48x32xi32>
    %c16_i32_28 = arith.constant 16 : i32
    %68 = vector.broadcast %c16_i32_28 : i32 to vector<48x32xi32>
    %69 = arith.cmpi slt, %29, %68 : vector<48x32xi32>
    %70 = arith.andi %67, %69 : vector<48x32xi1>
    %cst_29 = arith.constant 0.000000e+00 : f32
    %71 = vector.broadcast %cst_29 : f32 to vector<48x32xf32>
    %72 = arith.select %70, %27, %71 : vector<48x32xi1>, vector<48x32xf32>
    %c16_i32_30 = arith.constant 16 : i32
    %73 = vector.broadcast %c16_i32_30 : i32 to vector<48x32xi32>
    %74 = arith.cmpi sge, %29, %73 : vector<48x32xi32>
    %c24_i32_31 = arith.constant 24 : i32
    %75 = vector.broadcast %c24_i32_31 : i32 to vector<48x32xi32>
    %76 = arith.cmpi slt, %29, %75 : vector<48x32xi32>
    %77 = arith.andi %74, %76 : vector<48x32xi1>
    %cst_32 = arith.constant 0.000000e+00 : f32
    %78 = vector.broadcast %cst_32 : f32 to vector<48x32xf32>
    %79 = arith.select %77, %27, %78 : vector<48x32xi1>, vector<48x32xf32>
    %c24_i32_33 = arith.constant 24 : i32
    %80 = vector.broadcast %c24_i32_33 : i32 to vector<48x32xi32>
    %81 = arith.cmpi sge, %29, %80 : vector<48x32xi32>
    %c32_i32_34 = arith.constant 32 : i32
    %82 = vector.broadcast %c32_i32_34 : i32 to vector<48x32xi32>
    %83 = arith.cmpi slt, %29, %82 : vector<48x32xi32>
    %84 = arith.andi %81, %83 : vector<48x32xi1>
    %cst_35 = arith.constant 0.000000e+00 : f32
    %85 = vector.broadcast %cst_35 : f32 to vector<48x32xf32>
    %86 = arith.select %84, %27, %85 : vector<48x32xi1>, vector<48x32xf32>
    %87 = tpu.concatenate %65, %72, %79, %86 in 0 : vector<48x32xf32>, vector<48x32xf32>, vector<48x32xf32>, vector<48x32xf32> -> vector<192x32xf32>
    %c3 = arith.constant 3 : index
    %c0_36 = arith.constant 0 : index
    %c0_37 = arith.constant 0 : index
    %88 = vector.load %arg3[%c3, %c0_36, %c0_37] : memref<4x32x32xf32, #tpu.memory_space<vmem>>, vector<1x32x32xf32>
    %89 = vector.shape_cast %88 : vector<1x32x32xf32> to vector<32x32xf32>
    %cst_38 = arith.constant dense<0.000000e+00> : vector<192x32xf32>
    %90 = tpu.matmul %87, %89, %cst_38 {dimension_numbers = #tpu.dot_dimension_numbers<[1], [0], [0], [1], [0, 0, 1, 1], [], []>} : vector<192x32xf32>, vector<32x32xf32>, vector<192x32xf32> -> vector<192x32xf32>
    %cst_39 = arith.constant dense<0.000000e+00> : vector<64x48xf32>
    %91 = tpu.matmul %58, %22, %cst_39 {dimension_numbers = #tpu.dot_dimension_numbers<[1], [1], [0], [0], [0, 0, 1, 0], [], []>} : vector<64x32xf32>, vector<48x32xf32>, vector<64x48xf32> -> vector<64x48xf32>
    %92 = tpu.iota {dimensions = array<i32: 0>} : vector<16x48xi32>
    %93 = tpu.iota {dimensions = array<i32: 1>} : vector<16x48xi32>
    %c0_i32_40 = arith.constant 0 : i32
    %94 = vector.broadcast %c0_i32_40 : i32 to vector<16x48xi32>
    %95 = arith.cmpi sge, %92, %94 : vector<16x48xi32>
    %c8_i32_41 = arith.constant 8 : i32
    %96 = vector.broadcast %c8_i32_41 : i32 to vector<16x48xi32>
    %97 = arith.cmpi slt, %92, %96 : vector<16x48xi32>
    %98 = arith.andi %95, %97 : vector<16x48xi1>
    %c0_i32_42 = arith.constant 0 : i32
    %99 = vector.broadcast %c0_i32_42 : i32 to vector<16x48xi32>
    %100 = arith.cmpi sge, %93, %99 : vector<16x48xi32>
    %101 = arith.andi %98, %100 : vector<16x48xi1>
    %c8_i32_43 = arith.constant 8 : i32
    %102 = vector.broadcast %c8_i32_43 : i32 to vector<16x48xi32>
    %103 = arith.cmpi slt, %93, %102 : vector<16x48xi32>
    %104 = arith.andi %101, %103 : vector<16x48xi1>
    %c0_i32_44 = arith.constant 0 : i32
    %105 = vector.broadcast %c0_i32_44 : i32 to vector<16x48xi32>
    %106 = arith.subi %93, %105 : vector<16x48xi32>
    %c0_i32_45 = arith.constant 0 : i32
    %107 = vector.broadcast %c0_i32_45 : i32 to vector<16x48xi32>
    %108 = arith.subi %92, %107 : vector<16x48xi32>
    %109 = arith.cmpi sle, %106, %108 : vector<16x48xi32>
    %110 = arith.andi %104, %109 : vector<16x48xi1>
    %c0_i32_46 = arith.constant 0 : i32
    %111 = vector.broadcast %c0_i32_46 : i32 to vector<16x48xi32>
    %112 = arith.cmpi sge, %92, %111 : vector<16x48xi32>
    %c8_i32_47 = arith.constant 8 : i32
    %113 = vector.broadcast %c8_i32_47 : i32 to vector<16x48xi32>
    %114 = arith.cmpi slt, %92, %113 : vector<16x48xi32>
    %115 = arith.andi %112, %114 : vector<16x48xi1>
    %c8_i32_48 = arith.constant 8 : i32
    %116 = vector.broadcast %c8_i32_48 : i32 to vector<16x48xi32>
    %117 = arith.cmpi sge, %93, %116 : vector<16x48xi32>
    %118 = arith.andi %115, %117 : vector<16x48xi1>
    %c16_i32_49 = arith.constant 16 : i32
    %119 = vector.broadcast %c16_i32_49 : i32 to vector<16x48xi32>
    %120 = arith.cmpi slt, %93, %119 : vector<16x48xi32>
    %121 = arith.andi %118, %120 : vector<16x48xi1>
    %c8_i32_50 = arith.constant 8 : i32
    %122 = vector.broadcast %c8_i32_50 : i32 to vector<16x48xi32>
    %123 = arith.subi %93, %122 : vector<16x48xi32>
    %c0_i32_51 = arith.constant 0 : i32
    %124 = vector.broadcast %c0_i32_51 : i32 to vector<16x48xi32>
    %125 = arith.subi %92, %124 : vector<16x48xi32>
    %126 = arith.cmpi sle, %123, %125 : vector<16x48xi32>
    %127 = arith.andi %121, %126 : vector<16x48xi1>
    %c0_i32_52 = arith.constant 0 : i32
    %128 = vector.broadcast %c0_i32_52 : i32 to vector<16x48xi32>
    %129 = arith.cmpi sge, %92, %128 : vector<16x48xi32>
    %c8_i32_53 = arith.constant 8 : i32
    %130 = vector.broadcast %c8_i32_53 : i32 to vector<16x48xi32>
    %131 = arith.cmpi slt, %92, %130 : vector<16x48xi32>
    %132 = arith.andi %129, %131 : vector<16x48xi1>
    %c16_i32_54 = arith.constant 16 : i32
    %133 = vector.broadcast %c16_i32_54 : i32 to vector<16x48xi32>
    %134 = arith.cmpi sge, %93, %133 : vector<16x48xi32>
    %135 = arith.andi %132, %134 : vector<16x48xi1>
    %c24_i32_55 = arith.constant 24 : i32
    %136 = vector.broadcast %c24_i32_55 : i32 to vector<16x48xi32>
    %137 = arith.cmpi slt, %93, %136 : vector<16x48xi32>
    %138 = arith.andi %135, %137 : vector<16x48xi1>
    %c16_i32_56 = arith.constant 16 : i32
    %139 = vector.broadcast %c16_i32_56 : i32 to vector<16x48xi32>
    %140 = arith.subi %93, %139 : vector<16x48xi32>
    %c0_i32_57 = arith.constant 0 : i32
    %141 = vector.broadcast %c0_i32_57 : i32 to vector<16x48xi32>
    %142 = arith.subi %92, %141 : vector<16x48xi32>
    %143 = arith.cmpi sle, %140, %142 : vector<16x48xi32>
    %144 = arith.andi %138, %143 : vector<16x48xi1>
    %c8_i32_58 = arith.constant 8 : i32
    %145 = vector.broadcast %c8_i32_58 : i32 to vector<16x48xi32>
    %146 = arith.cmpi sge, %92, %145 : vector<16x48xi32>
    %c16_i32_59 = arith.constant 16 : i32
    %147 = vector.broadcast %c16_i32_59 : i32 to vector<16x48xi32>
    %148 = arith.cmpi slt, %92, %147 : vector<16x48xi32>
    %149 = arith.andi %146, %148 : vector<16x48xi1>
    %c24_i32_60 = arith.constant 24 : i32
    %150 = vector.broadcast %c24_i32_60 : i32 to vector<16x48xi32>
    %151 = arith.cmpi sge, %93, %150 : vector<16x48xi32>
    %152 = arith.andi %149, %151 : vector<16x48xi1>
    %c32_i32_61 = arith.constant 32 : i32
    %153 = vector.broadcast %c32_i32_61 : i32 to vector<16x48xi32>
    %154 = arith.cmpi slt, %93, %153 : vector<16x48xi32>
    %155 = arith.andi %152, %154 : vector<16x48xi1>
    %c24_i32_62 = arith.constant 24 : i32
    %156 = vector.broadcast %c24_i32_62 : i32 to vector<16x48xi32>
    %157 = arith.subi %93, %156 : vector<16x48xi32>
    %c8_i32_63 = arith.constant 8 : i32
    %158 = vector.broadcast %c8_i32_63 : i32 to vector<16x48xi32>
    %159 = arith.subi %92, %158 : vector<16x48xi32>
    %160 = arith.cmpi sle, %157, %159 : vector<16x48xi32>
    %161 = arith.andi %155, %160 : vector<16x48xi1>
    %c8_i32_64 = arith.constant 8 : i32
    %162 = vector.broadcast %c8_i32_64 : i32 to vector<16x48xi32>
    %163 = arith.cmpi sge, %92, %162 : vector<16x48xi32>
    %c16_i32_65 = arith.constant 16 : i32
    %164 = vector.broadcast %c16_i32_65 : i32 to vector<16x48xi32>
    %165 = arith.cmpi slt, %92, %164 : vector<16x48xi32>
    %166 = arith.andi %163, %165 : vector<16x48xi1>
    %c32_i32_66 = arith.constant 32 : i32
    %167 = vector.broadcast %c32_i32_66 : i32 to vector<16x48xi32>
    %168 = arith.cmpi sge, %93, %167 : vector<16x48xi32>
    %169 = arith.andi %166, %168 : vector<16x48xi1>
    %c40_i32 = arith.constant 40 : i32
    %170 = vector.broadcast %c40_i32 : i32 to vector<16x48xi32>
    %171 = arith.cmpi slt, %93, %170 : vector<16x48xi32>
    %172 = arith.andi %169, %171 : vector<16x48xi1>
    %c32_i32_67 = arith.constant 32 : i32
    %173 = vector.broadcast %c32_i32_67 : i32 to vector<16x48xi32>
    %174 = arith.subi %93, %173 : vector<16x48xi32>
    %c8_i32_68 = arith.constant 8 : i32
    %175 = vector.broadcast %c8_i32_68 : i32 to vector<16x48xi32>
    %176 = arith.subi %92, %175 : vector<16x48xi32>
    %177 = arith.cmpi sle, %174, %176 : vector<16x48xi32>
    %178 = arith.andi %172, %177 : vector<16x48xi1>
    %c8_i32_69 = arith.constant 8 : i32
    %179 = vector.broadcast %c8_i32_69 : i32 to vector<16x48xi32>
    %180 = arith.cmpi sge, %92, %179 : vector<16x48xi32>
    %c16_i32_70 = arith.constant 16 : i32
    %181 = vector.broadcast %c16_i32_70 : i32 to vector<16x48xi32>
    %182 = arith.cmpi slt, %92, %181 : vector<16x48xi32>
    %183 = arith.andi %180, %182 : vector<16x48xi1>
    %c40_i32_71 = arith.constant 40 : i32
    %184 = vector.broadcast %c40_i32_71 : i32 to vector<16x48xi32>
    %185 = arith.cmpi sge, %93, %184 : vector<16x48xi32>
    %186 = arith.andi %183, %185 : vector<16x48xi1>
    %c48_i32 = arith.constant 48 : i32
    %187 = vector.broadcast %c48_i32 : i32 to vector<16x48xi32>
    %188 = arith.cmpi slt, %93, %187 : vector<16x48xi32>
    %189 = arith.andi %186, %188 : vector<16x48xi1>
    %c40_i32_72 = arith.constant 40 : i32
    %190 = vector.broadcast %c40_i32_72 : i32 to vector<16x48xi32>
    %191 = arith.subi %93, %190 : vector<16x48xi32>
    %c8_i32_73 = arith.constant 8 : i32
    %192 = vector.broadcast %c8_i32_73 : i32 to vector<16x48xi32>
    %193 = arith.subi %92, %192 : vector<16x48xi32>
    %194 = arith.cmpi sle, %191, %193 : vector<16x48xi32>
    %195 = arith.andi %189, %194 : vector<16x48xi1>
    %196 = arith.ori %110, %127 : vector<16x48xi1>
    %197 = arith.ori %196, %144 : vector<16x48xi1>
    %198 = arith.ori %197, %161 : vector<16x48xi1>
    %199 = arith.ori %198, %178 : vector<16x48xi1>
    %200 = arith.ori %199, %195 : vector<16x48xi1>
    %cst_74 = arith.constant 0.000000e+00 : f32
    %cst_75 = arith.constant -1.000000e+30 : f32
    %201 = vector.broadcast %cst_74 : f32 to vector<16x48xf32>
    %202 = vector.broadcast %cst_75 : f32 to vector<16x48xf32>
    %203 = arith.select %200, %201, %202 : vector<16x48xi1>, vector<16x48xf32>
    %204 = tpu.concatenate %203, %203, %203, %203 in 0 : vector<16x48xf32>, vector<16x48xf32>, vector<16x48xf32>, vector<16x48xf32> -> vector<64x48xf32>
    %205 = arith.addf %91, %204 : vector<64x48xf32>
    %cst_76 = arith.constant dense<0xFF800000> : vector<64xf32>
    %206 = vector.multi_reduction <maximumf>, %205, %cst_76 [1] : vector<64x48xf32> to vector<64xf32>
    %207 = vector.shape_cast %206 : vector<64xf32> to vector<64x1xf32>
    %208 = vector.broadcast %207 : vector<64x1xf32> to vector<64x48xf32>
    %209 = arith.subf %205, %208 : vector<64x48xf32>
    %210 = math.exp %209 : vector<64x48xf32>
    %cst_77 = arith.constant dense<0.000000e+00> : vector<64xf32>
    %211 = vector.multi_reduction <add>, %210, %cst_77 [1] : vector<64x48xf32> to vector<64xf32>
    %212 = vector.shape_cast %211 : vector<64xf32> to vector<64x1xf32>
    %213 = tpu.reciprocal %212 {approx = true} : vector<64x1xf32> -> vector<64x1xf32>
    %214 = vector.broadcast %213 : vector<64x1xf32> to vector<64x48xf32>
    %215 = arith.mulf %210, %214 : vector<64x48xf32>
    %216 = vector.extract_strided_slice %215 {offsets = [0, 0], sizes = [16, 48], strides = [1, 1]} : vector<64x48xf32> to vector<16x48xf32>
    %217 = vector.extract_strided_slice %90 {offsets = [0, 0], sizes = [48, 32], strides = [1, 1]} : vector<192x32xf32> to vector<48x32xf32>
    %cst_78 = arith.constant dense<0.000000e+00> : vector<16x32xf32>
    %218 = tpu.matmul %216, %217, %cst_78 {dimension_numbers = #tpu.dot_dimension_numbers<[1], [0], [0], [1], [0, 0, 1, 1], [], []>} : vector<16x48xf32>, vector<48x32xf32>, vector<16x32xf32> -> vector<16x32xf32>
    %219 = vector.extract_strided_slice %215 {offsets = [16, 0], sizes = [16, 48], strides = [1, 1]} : vector<64x48xf32> to vector<16x48xf32>
    %220 = vector.extract_strided_slice %90 {offsets = [48, 0], sizes = [48, 32], strides = [1, 1]} : vector<192x32xf32> to vector<48x32xf32>
    %cst_79 = arith.constant dense<0.000000e+00> : vector<16x32xf32>
    %221 = tpu.matmul %219, %220, %cst_79 {dimension_numbers = #tpu.dot_dimension_numbers<[1], [0], [0], [1], [0, 0, 1, 1], [], []>} : vector<16x48xf32>, vector<48x32xf32>, vector<16x32xf32> -> vector<16x32xf32>
    %222 = arith.addf %218, %221 : vector<16x32xf32>
    %223 = vector.extract_strided_slice %215 {offsets = [32, 0], sizes = [16, 48], strides = [1, 1]} : vector<64x48xf32> to vector<16x48xf32>
    %224 = vector.extract_strided_slice %90 {offsets = [96, 0], sizes = [48, 32], strides = [1, 1]} : vector<192x32xf32> to vector<48x32xf32>
    %cst_80 = arith.constant dense<0.000000e+00> : vector<16x32xf32>
    %225 = tpu.matmul %223, %224, %cst_80 {dimension_numbers = #tpu.dot_dimension_numbers<[1], [0], [0], [1], [0, 0, 1, 1], [], []>} : vector<16x48xf32>, vector<48x32xf32>, vector<16x32xf32> -> vector<16x32xf32>
    %226 = arith.addf %222, %225 : vector<16x32xf32>
    %227 = vector.extract_strided_slice %215 {offsets = [48, 0], sizes = [16, 48], strides = [1, 1]} : vector<64x48xf32> to vector<16x48xf32>
    %228 = vector.extract_strided_slice %90 {offsets = [144, 0], sizes = [48, 32], strides = [1, 1]} : vector<192x32xf32> to vector<48x32xf32>
    %cst_81 = arith.constant dense<0.000000e+00> : vector<16x32xf32>
    %229 = tpu.matmul %227, %228, %cst_81 {dimension_numbers = #tpu.dot_dimension_numbers<[1], [0], [0], [1], [0, 0, 1, 1], [], []>} : vector<16x48xf32>, vector<48x32xf32>, vector<16x32xf32> -> vector<16x32xf32>
    %230 = arith.addf %226, %229 : vector<16x32xf32>
    %231 = vector.broadcast %8 : vector<1x32xf32> to vector<16x32xf32>
    %232 = arith.addf %230, %231 : vector<16x32xf32>
    %233 = arith.addf %1, %232 : vector<16x32xf32>
    %cst_82 = arith.constant dense<0.000000e+00> : vector<16xf32>
    %234 = vector.multi_reduction <add>, %233, %cst_82 [1] : vector<16x32xf32> to vector<16xf32>
    %235 = vector.shape_cast %234 : vector<16xf32> to vector<16x1xf32>
    %cst_83 = arith.constant 3.200000e+01 : f32
    %236 = vector.broadcast %cst_83 : f32 to vector<16x1xf32>
    %237 = arith.divf %235, %236 : vector<16x1xf32>
    %238 = vector.broadcast %237 : vector<16x1xf32> to vector<16x32xf32>
    %239 = arith.subf %233, %238 : vector<16x32xf32>
    %240 = arith.mulf %239, %239 : vector<16x32xf32>
    %cst_84 = arith.constant dense<0.000000e+00> : vector<16xf32>
    %241 = vector.multi_reduction <add>, %240, %cst_84 [1] : vector<16x32xf32> to vector<16xf32>
    %242 = vector.shape_cast %241 : vector<16xf32> to vector<16x1xf32>
    %cst_85 = arith.constant 3.200000e+01 : f32
    %243 = vector.broadcast %cst_85 : f32 to vector<16x1xf32>
    %244 = arith.divf %242, %243 : vector<16x1xf32>
    %cst_86 = arith.constant 9.99999974E-6 : f32
    %245 = vector.broadcast %cst_86 : f32 to vector<16x1xf32>
    %246 = arith.addf %244, %245 : vector<16x1xf32>
    %247 = math.rsqrt %246 : vector<16x1xf32>
    %248 = vector.broadcast %247 : vector<16x1xf32> to vector<16x32xf32>
    %249 = arith.mulf %239, %248 : vector<16x32xf32>
    %250 = vector.broadcast %9 : vector<1x32xf32> to vector<16x32xf32>
    %251 = arith.mulf %249, %250 : vector<16x32xf32>
    %252 = vector.broadcast %10 : vector<1x32xf32> to vector<16x32xf32>
    %253 = arith.addf %251, %252 : vector<16x32xf32>
    %c0_87 = arith.constant 0 : index
    %c0_88 = arith.constant 0 : index
    %c0_89 = arith.constant 0 : index
    %254 = vector.load %arg2[%c0_87, %c0_88, %c0_89] : memref<2x8x1xf32, #tpu.memory_space<vmem>>, vector<2x8x1xf32>
    %255 = vector.shape_cast %254 : vector<2x8x1xf32> to vector<16x1xf32>
    %256 = vector.broadcast %255 : vector<16x1xf32> to vector<16x32xf32>
    %257 = arith.mulf %253, %256 : vector<16x32xf32>
    %258 = vector.shape_cast %257 : vector<16x32xf32> to vector<2x8x32xf32>
    %c0_90 = arith.constant 0 : index
    %c0_91 = arith.constant 0 : index
    %c0_92 = arith.constant 0 : index
    %259 = vector.load %arg5[%c0_90, %c0_91, %c0_92] : memref<2x8x32xf32, #tpu.memory_space<vmem>>, vector<2x8x32xf32>
    tpu.vector_store %arg5[%c0_90, %c0_91, %c0_92], %258 {strides = array<i32>} : memref<2x8x32xf32, #tpu.memory_space<vmem>>, vector<2x8x32xf32>,
    return
  }
}

</mosaic_0001>

<llo_original>
// kernel: tpu_custom_call.1
$region0: #{tpu_custom_call.1}
  #allocation0 [shape = 'u32[]', space=smem, size = 0x4, offset = 0x4, fixed_abs, tag = 'smem constant byte address 0x4 - core index']
  #allocation1 [shape = 'u32[144,128]{1,0:T(1,128)}', space=vmem, size = 0x12000, scoped, tag = 'internal scratch']
  %s0 = inlined_call_operand.vmem [shape: f32[2,8,32], index: 0, kind: input, shape index: {}]
  %s1 = inlined_call_operand.hbm [shape: f32[2,24,32], index: 1, kind: input, shape index: {}]
  %s2 = inlined_call_operand.vmem [shape: f32[2,8,1], index: 2, kind: input, shape index: {}]
  %s3 = inlined_call_operand.hbm [shape: f32[4,32,32], index: 3, kind: input, shape index: {}]
  %s4 = inlined_call_operand.vmem [shape: f32[6,32], index: 4, kind: input, shape index: {}]
  %s5 = inlined_call_operand.hbm [shape: f32[2,8,32], index: 5, kind: output, shape index: {}]
  %s6 = sld [smem:[#allocation0]]
  $region38: #{tpu_custom_call.1} parent=0
    _
  %s8 = ssub.s32 1, %s6
  %s9 = scalar_select 0, %s8, %s6
  $region1: #{tpu_custom_call.1} parent=0
    #allocation2 [shape = 'u8[24576]{0}', space=vmem, size = 0x6000, scoped, tag = 'input window, operand 1, single buffered']
    #allocation3 [shape = 's32[1]{0}', space=sflag, size = 0x4, scoped, tag = 'scoped memory for tpu_custom_call.1']
    #allocation4 [shape = 's32[1]{0}', space=sflag, size = 0x4, scoped, tag = 'scoped memory for tpu_custom_call.1']
    #allocation5 [shape = 'u8[65536]{0}', space=vmem, size = 0x10000, scoped, tag = 'input window, operand 3, single buffered']
    #allocation6 [shape = 's32[1]{0}', space=sflag, size = 0x4, scoped, tag = 'scoped memory for tpu_custom_call.1']
    #allocation7 [shape = 'u8[8192]{0}', space=vmem, size = 0x2000, scoped, tag = 'output window, operand 0, single buffered']
    %10 = vsyncpa [#allocation3], 0
    %11 = vsyncpa [#allocation6], 0
    %12 = vsyncpa [#allocation4], 0
    // Predicated region
    $region2: #{tpu_custom_call.1} parent=1 // pred_check
      _
    $region3: #{tpu_custom_call.1} parent=1 // pred_check_branch
      %14 = sbr.rel (0) target = $region5
    $region4: #{tpu_custom_call.1} parent=1 // pred_region
      _
    $region5: #{tpu_custom_call.1} parent=1 // pred_fallthru
      _
    // Predicated region
    $region6: #{tpu_custom_call.1} parent=1 // pred_check
      _
    $region7: #{tpu_custom_call.1} parent=1 // pred_check_branch
      %16 = sbr.rel (0) target = $region9
    $region8: #{tpu_custom_call.1} parent=1 // pred_region
      %s18 = ssub.s32 768, 768
      %19 = vsyncadd [#allocation3], %s18
      %s20 = sshll.u32 [#allocation2], 4
      %s21 = int_to_ptr.vmem [resolvable:$true] %s20
      %26 = dma.hbm_to_vmem [thread:$0]  %s1, 768, %s21, [#allocation3], 128, 128, 8
    $region9: #{tpu_custom_call.1} parent=1 // pred_fallthru
      _
    // Predicated region
    $region10: #{tpu_custom_call.1} parent=1 // pred_check
      _
    $region11: #{tpu_custom_call.1} parent=1 // pred_check_branch
      %28 = sbr.rel (0) target = $region13
    $region12: #{tpu_custom_call.1} parent=1 // pred_region
      _
    $region13: #{tpu_custom_call.1} parent=1 // pred_fallthru
      _
    // Predicated region
    $region14: #{tpu_custom_call.1} parent=1 // pred_check
      _
    $region15: #{tpu_custom_call.1} parent=1 // pred_check_branch
      %30 = sbr.rel (0) target = $region17
    $region16: #{tpu_custom_call.1} parent=1 // pred_region
      %s32 = ssub.s32 2048, 2048
      %33 = vsyncadd [#allocation6], %s32
      %s34 = sshll.u32 [#allocation5], 4
      %s35 = int_to_ptr.vmem [resolvable:$true] %s34
      %40 = dma.hbm_to_vmem [thread:$0]  %s3, 2048, %s35, [#allocation6], 128, 128, 8
    $region17: #{tpu_custom_call.1} parent=1 // pred_fallthru
      _
    // Predicated region
    $region18: #{tpu_custom_call.1} parent=1 // pred_check
      _
    $region19: #{tpu_custom_call.1} parent=1 // pred_check_branch
      %42 = sbr.rel (0) target = $region21
    $region20: #{tpu_custom_call.1} parent=1 // pred_region
      _
    $region21: #{tpu_custom_call.1} parent=1 // pred_fallthru
      _
    // Predicated region
    $region22: #{tpu_custom_call.1} parent=1 // pred_check
      _
    $region23: #{tpu_custom_call.1} parent=1 // pred_check_branch
      %44 = sbr.rel (0) target = $region25
    $region24: #{tpu_custom_call.1} parent=1 // pred_region
      %45 = dma.done [#allocation3], 768
    $region25: #{tpu_custom_call.1} parent=1 // pred_fallthru
      _
    // Predicated region
    $region26: #{tpu_custom_call.1} parent=1 // pred_check
      _
    $region27: #{tpu_custom_call.1} parent=1 // pred_check_branch
      %47 = sbr.rel (0) target = $region29
    $region28: #{tpu_custom_call.1} parent=1 // pred_region
      %48 = dma.done [#allocation6], 2048
    $region29: #{tpu_custom_call.1} parent=1 // pred_fallthru
      _
    %v49 = vld [vmem:[%s0] sm:$0xff]
    %v50 = vld [vmem:[%s0 + $0x8] sm:$0xff]
    %v51 = vld [vmem:[#allocation2] sm:$0xff]
    %v52 = vld [vmem:[#allocation2 + $0x8] sm:$0xff]
    %v53 = vld [vmem:[#allocation2 + $0x10] sm:$0xff]
    %v54 = vld [vmem:[#allocation2 + $0x18] sm:$0xff]
    %v55 = vld [vmem:[#allocation2 + $0x20] sm:$0xff]
    %v56 = vld [vmem:[#allocation2 + $0x28] sm:$0xff]
    %v57 = vld [vmem:[%s4] sm:$0x3f]
    %v58 = vld [vmem:[#allocation5] sm:$0xff]
    %v59 = vld [vmem:[#allocation5 + $0x8] sm:$0xff]
    %v60 = vld [vmem:[#allocation5 + $0x10] sm:$0xff]
    %v61 = vld [vmem:[#allocation5 + $0x18] sm:$0xff]
    %v62 = vlaneseq
    %v63 = vshrl.u32 %v62, 7
    %v64 = vsub.s32 0, %v63
    %v65 = vrot.slane %v57, %v64
    %vm66 = vcmask 261120
    %v68 = vsel %vm66, %v49, 0
    %v71 = vsel %vm66, %v50, 0
    %73 = vmatprep.subr.mxu0 0.0
    %74 = vmatpush1.msra.mxu0 0.0
    %75 = vmatprep.subr.mxu0 0.0
    %76 = vmatpush1.msra.mxu0 0.0
    %77 = vmatprep.subr.mxu0 0.0
    %78 = vmatpush1.msra.mxu0 0.0
    %79 = vmatprep.subr.mxu0 0.0
    %80 = vmatpush1.msra.mxu0 0.0
    %81 = vmatprep.subr.mxu0 0.0
    %82 = vmatpush1.msra.mxu0 0.0
    %83 = vmatprep.subr.mxu0 0.0
    %84 = vmatpush1.msra.mxu0 0.0
    %85 = vmatprep.subr.mxu0 0.0
    %86 = vmatpush1.msra.mxu0 0.0
    %87 = vmatprep.subr.mxu0 0.0
    %88 = vmatpush1.msra.mxu0 0.0
    %89 = vmatprep.subr.mxu0 0.0
    %90 = vmatpush1.msra.mxu0 0.0
    %91 = vmatprep.subr.mxu0 0.0
    %92 = vmatpush1.msra.mxu0 0.0
    %93 = vmatprep.subr.mxu0 0.0
    %94 = vmatpush1.msra.mxu0 0.0
    %95 = vmatprep.subr.mxu0 0.0
    %96 = vmatpush1.msra.mxu0 0.0
    %97 = vmatprep.subr.mxu0 0.0
    %98 = vmatpush1.msra.mxu0 %v61
    %99 = vmatprep.subr.mxu0 0.0
    %100 = vmatpush1.msra.mxu0 %v60
    %101 = vmatprep.subr.mxu0 0.0
    %102 = vmatpush1.msra.mxu0 %v59
    %103 = vmatprep.subr.mxu0 0.0
    %104 = vmatpush1.msra.mxu0 %v58
    %105 = vmatprep.subr.mxu0 0.0
    %106 = vmatpush2.msra.mxu0 0.0
    %107 = vmatprep.subr.mxu0 0.0
    %108 = vmatpush2.msra.mxu0 0.0
    %109 = vmatprep.subr.mxu0 0.0
    %110 = vmatpush2.msra.mxu0 0.0
    %111 = vmatprep.subr.mxu0 0.0
    %112 = vmatpush2.msra.mxu0 0.0
    %113 = vmatprep.subr.mxu0 0.0
    %114 = vmatpush2.msra.mxu0 0.0
    %115 = vmatprep.subr.mxu0 0.0
    %116 = vmatpush2.msra.mxu0 0.0
    %117 = vmatprep.subr.mxu0 0.0
    %118 = vmatpush2.msra.mxu0 0.0
    %119 = vmatprep.subr.mxu0 0.0
    %120 = vmatpush2.msra.mxu0 0.0
    %121 = vmatprep.subr.mxu0 0.0
    %122 = vmatpush2.msra.mxu0 0.0
    %123 = vmatprep.subr.mxu0 0.0
    %124 = vmatpush2.msra.mxu0 0.0
    %125 = vmatprep.subr.mxu0 0.0
    %126 = vmatpush2.msra.mxu0 0.0
    %127 = vmatprep.subr.mxu0 0.0
    %128 = vmatpush2.msra.mxu0 0.0
    %129 = vmatprep.subr.mxu0 0.0
    %130 = vmatpush2.msra.mxu0 0.0
    %131 = vmatprep.subr.mxu0 0.0
    %132 = vmatpush2.msra.mxu0 0.0
    %133 = vmatprep.subr.mxu0 0.0
    %134 = vmatpush2.msra.mxu0 0.0
    %135 = vmatprep.subr.mxu0 0.0
    %136 = vmatpush2.msra.mxu0 0.0
    %137 = vmatprep.mubr.f32.mxu0 0.0
    %138 = vmatmul.mubr.f32.gmra.mxu0 %v68
    %v139 = vpop.f32.mrf.mxu0
    %v140 = vadd.f32 %v65, %v139
    %v141 = vpop.f32.mrf.mxu0
    %142 = vmatprep.mubr.f32.mxu0 0.0
    %143 = vmatmul.mubr.f32.gmra.mxu0 %v71
    %v144 = vpop.f32.mrf.mxu0
    %v145 = vadd.f32 %v65, %v144
    %v146 = vpop.f32.mrf.mxu0
    %147 = vdwg.mxu0
    %v148 = vmul.f32 %v140, 0.35355338
    %v149 = vmul.f32 %v145, 0.35355338
    %s150 = scalar_lea.vmem [#allocation5], 32
    %v151 = vld [vmem:[%s150] sm:$0xff]
    %v152 = vld [vmem:[%s150 + $0x8] sm:$0xff]
    %v153 = vld [vmem:[%s150 + $0x10] sm:$0xff]
    %v154 = vld [vmem:[%s150 + $0x18] sm:$0xff]
    %v155 = vlaneseq
    %v156 = vshrl.u32 %v155, 7
    %v157 = vsub.s32 1, %v156
    %v158 = vrot.slane %v57, %v157
    %v160 = vsel %vm66, %v51, 0
    %v163 = vsel %vm66, %v52, 0
    %v166 = vsel %vm66, %v53, 0
    %v169 = vsel %vm66, %v54, 0
    %v172 = vsel %vm66, %v55, 0
    %v175 = vsel %vm66, %v56, 0
    %177 = vmatprep.subr.mxu0 0.0
    %178 = vmatpush1.msra.mxu0 0.0
    %179 = vmatprep.subr.mxu0 0.0
    %180 = vmatpush1.msra.mxu0 0.0
    %181 = vmatprep.subr.mxu0 0.0
    %182 = vmatpush1.msra.mxu0 0.0
    %183 = vmatprep.subr.mxu0 0.0
    %184 = vmatpush1.msra.mxu0 0.0
    %185 = vmatprep.subr.mxu0 0.0
    %186 = vmatpush1.msra.mxu0 0.0
    %187 = vmatprep.subr.mxu0 0.0
    %188 = vmatpush1.msra.mxu0 0.0
    %189 = vmatprep.subr.mxu0 0.0
    %190 = vmatpush1.msra.mxu0 0.0
    %191 = vmatprep.subr.mxu0 0.0
    %192 = vmatpush1.msra.mxu0 0.0
    %193 = vmatprep.subr.mxu0 0.0
    %194 = vmatpush1.msra.mxu0 0.0
    %195 = vmatprep.subr.mxu0 0.0
    %196 = vmatpush1.msra.mxu0 0.0
    %197 = vmatprep.subr.mxu0 0.0
    %198 = vmatpush1.msra.mxu0 0.0
    %199 = vmatprep.subr.mxu0 0.0
    %200 = vmatpush1.msra.mxu0 0.0
    %201 = vmatprep.subr.mxu0 0.0
    %202 = vmatpush1.msra.mxu0 %v154
    %203 = vmatprep.subr.mxu0 0.0
    %204 = vmatpush1.msra.mxu0 %v153
    %205 = vmatprep.subr.mxu0 0.0
    %206 = vmatpush1.msra.mxu0 %v152
    %207 = vmatprep.subr.mxu0 0.0
    %208 = vmatpush1.msra.mxu0 %v151
    %209 = vmatprep.subr.mxu0 0.0
    %210 = vmatpush2.msra.mxu0 0.0
    %211 = vmatprep.subr.mxu0 0.0
    %212 = vmatpush2.msra.mxu0 0.0
    %213 = vmatprep.subr.mxu0 0.0
    %214 = vmatpush2.msra.mxu0 0.0
    %215 = vmatprep.subr.mxu0 0.0
    %216 = vmatpush2.msra.mxu0 0.0
    %217 = vmatprep.subr.mxu0 0.0
    %218 = vmatpush2.msra.mxu0 0.0
    %219 = vmatprep.subr.mxu0 0.0
    %220 = vmatpush2.msra.mxu0 0.0
    %221 = vmatprep.subr.mxu0 0.0
    %222 = vmatpush2.msra.mxu0 0.0
    %223 = vmatprep.subr.mxu0 0.0
    %224 = vmatpush2.msra.mxu0 0.0
    %225 = vmatprep.subr.mxu0 0.0
    %226 = vmatpush2.msra.mxu0 0.0
    %227 = vmatprep.subr.mxu0 0.0
    %228 = vmatpush2.msra.mxu0 0.0
    %229 = vmatprep.subr.mxu0 0.0
    %230 = vmatpush2.msra.mxu0 0.0
    %231 = vmatprep.subr.mxu0 0.0
    %232 = vmatpush2.msra.mxu0 0.0
    %233 = vmatprep.subr.mxu0 0.0
    %234 = vmatpush2.msra.mxu0 0.0
    %235 = vmatprep.subr.mxu0 0.0
    %236 = vmatpush2.msra.mxu0 0.0
    %237 = vmatprep.subr.mxu0 0.0
    %238 = vmatpush2.msra.mxu0 0.0
    %239 = vmatprep.subr.mxu0 0.0
    %240 = vmatpush2.msra.mxu0 0.0
    %241 = vmatprep.mubr.f32.mxu0 0.0
    %242 = vmatmul.mubr.f32.gmra.mxu0 %v160
    %v243 = vpop.f32.mrf.mxu0
    %v244 = vadd.f32 %v158, %v243
    %v245 = vpop.f32.mrf.mxu0
    %246 = vmatprep.mubr.f32.mxu0 0.0
    %247 = vmatmul.mubr.f32.gmra.mxu0 %v163
    %v248 = vpop.f32.mrf.mxu0
    %v249 = vadd.f32 %v158, %v248
    %v250 = vpop.f32.mrf.mxu0
    %251 = vmatprep.mubr.f32.mxu0 0.0
    %252 = vmatmul.mubr.f32.gmra.mxu0 %v166
    %v253 = vpop.f32.mrf.mxu0
    %v254 = vadd.f32 %v158, %v253
    %v255 = vpop.f32.mrf.mxu0
    %256 = vmatprep.mubr.f32.mxu0 0.0
    %257 = vmatmul.mubr.f32.gmra.mxu0 %v169
    %v258 = vpop.f32.mrf.mxu0
    %v259 = vadd.f32 %v158, %v258
    %v260 = vpop.f32.mrf.mxu0
    %261 = vmatprep.mubr.f32.mxu0 0.0
    %262 = vmatmul.mubr.f32.gmra.mxu0 %v172
    %v263 = vpop.f32.mrf.mxu0
    %v264 = vadd.f32 %v158, %v263
    %v265 = vpop.f32.mrf.mxu0
    %266 = vmatprep.mubr.f32.mxu0 0.0
    %267 = vmatmul.mubr.f32.gmra.mxu0 %v175
    %v268 = vpop.f32.mrf.mxu0
    %v269 = vadd.f32 %v158, %v268
    %v270 = vpop.f32.mrf.mxu0
    %271 = vdwg.mxu0
    %s272 = scalar_lea.vmem [#allocation5], 64
    %v273 = vld [vmem:[%s272] sm:$0xff]
    %v274 = vld [vmem:[%s272 + $0x8] sm:$0xff]
    %v275 = vld [vmem:[%s272 + $0x10] sm:$0xff]
    %v276 = vld [vmem:[%s272 + $0x18] sm:$0xff]
    %v277 = vlaneseq
    %v278 = vshrl.u32 %v277, 7
    %v279 = vsub.s32 2, %v278
    %v280 = vrot.slane %v57, %v279
    %281 = vmatprep.subr.mxu0 0.0
    %282 = vmatpush1.msra.mxu0 0.0
    %283 = vmatprep.subr.mxu0 0.0
    %284 = vmatpush1.msra.mxu0 0.0
    %285 = vmatprep.subr.mxu0 0.0
    %286 = vmatpush1.msra.mxu0 0.0
    %287 = vmatprep.subr.mxu0 0.0
    %288 = vmatpush1.msra.mxu0 0.0
    %289 = vmatprep.subr.mxu0 0.0
    %290 = vmatpush1.msra.mxu0 0.0
    %291 = vmatprep.subr.mxu0 0.0
    %292 = vmatpush1.msra.mxu0 0.0
    %293 = vmatprep.subr.mxu0 0.0
    %294 = vmatpush1.msra.mxu0 0.0
    %295 = vmatprep.subr.mxu0 0.0
    %296 = vmatpush1.msra.mxu0 0.0
    %297 = vmatprep.subr.mxu0 0.0
    %298 = vmatpush1.msra.mxu0 0.0
    %299 = vmatprep.subr.mxu0 0.0
    %300 = vmatpush1.msra.mxu0 0.0
    %301 = vmatprep.subr.mxu0 0.0
    %302 = vmatpush1.msra.mxu0 0.0
    %303 = vmatprep.subr.mxu0 0.0
    %304 = vmatpush1.msra.mxu0 0.0
    %305 = vmatprep.subr.mxu0 0.0
    %306 = vmatpush1.msra.mxu0 %v276
    %307 = vmatprep.subr.mxu0 0.0
    %308 = vmatpush1.msra.mxu0 %v275
    %309 = vmatprep.subr.mxu0 0.0
    %310 = vmatpush1.msra.mxu0 %v274
    %311 = vmatprep.subr.mxu0 0.0
    %312 = vmatpush1.msra.mxu0 %v273
    %313 = vmatprep.subr.mxu0 0.0
    %314 = vmatpush2.msra.mxu0 0.0
    %315 = vmatprep.subr.mxu0 0.0
    %316 = vmatpush2.msra.mxu0 0.0
    %317 = vmatprep.subr.mxu0 0.0
    %318 = vmatpush2.msra.mxu0 0.0
    %319 = vmatprep.subr.mxu0 0.0
    %320 = vmatpush2.msra.mxu0 0.0
    %321 = vmatprep.subr.mxu0 0.0
    %322 = vmatpush2.msra.mxu0 0.0
    %323 = vmatprep.subr.mxu0 0.0
    %324 = vmatpush2.msra.mxu0 0.0
    %325 = vmatprep.subr.mxu0 0.0
    %326 = vmatpush2.msra.mxu0 0.0
    %327 = vmatprep.subr.mxu0 0.0
    %328 = vmatpush2.msra.mxu0 0.0
    %329 = vmatprep.subr.mxu0 0.0
    %330 = vmatpush2.msra.mxu0 0.0
    %331 = vmatprep.subr.mxu0 0.0
    %332 = vmatpush2.msra.mxu0 0.0
    %333 = vmatprep.subr.mxu0 0.0
    %334 = vmatpush2.msra.mxu0 0.0
    %335 = vmatprep.subr.mxu0 0.0
    %336 = vmatpush2.msra.mxu0 0.0
    %337 = vmatprep.subr.mxu0 0.0
    %338 = vmatpush2.msra.mxu0 0.0
    %339 = vmatprep.subr.mxu0 0.0
    %340 = vmatpush2.msra.mxu0 0.0
    %341 = vmatprep.subr.mxu0 0.0
    %342 = vmatpush2.msra.mxu0 0.0
    %343 = vmatprep.subr.mxu0 0.0
    %344 = vmatpush2.msra.mxu0 0.0
    %345 = vmatprep.mubr.f32.mxu0 0.0
    %346 = vmatmul.mubr.f32.gmra.mxu0 %v160
    %v347 = vpop.f32.mrf.mxu0
    %v348 = vadd.f32 %v280, %v347
    %v349 = vpop.f32.mrf.mxu0
    %350 = vmatprep.mubr.f32.mxu0 0.0
    %351 = vmatmul.mubr.f32.gmra.mxu0 %v163
    %v352 = vpop.f32.mrf.mxu0
    %v353 = vadd.f32 %v280, %v352
    %v354 = vpop.f32.mrf.mxu0
    %355 = vmatprep.mubr.f32.mxu0 0.0
    %356 = vmatmul.mubr.f32.gmra.mxu0 %v166
    %v357 = vpop.f32.mrf.mxu0
    %v358 = vadd.f32 %v280, %v357
    %v359 = vpop.f32.mrf.mxu0
    %360 = vmatprep.mubr.f32.mxu0 0.0
    %361 = vmatmul.mubr.f32.gmra.mxu0 %v169
    %v362 = vpop.f32.mrf.mxu0
    %v363 = vadd.f32 %v280, %v362
    %v364 = vpop.f32.mrf.mxu0
    %365 = vmatprep.mubr.f32.mxu0 0.0
    %366 = vmatmul.mubr.f32.gmra.mxu0 %v172
    %v367 = vpop.f32.mrf.mxu0
    %v368 = vadd.f32 %v280, %v367
    %v369 = vpop.f32.mrf.mxu0
    %370 = vmatprep.mubr.f32.mxu0 0.0
    %371 = vmatmul.mubr.f32.gmra.mxu0 %v175
    %v372 = vpop.f32.mrf.mxu0
    %v373 = vadd.f32 %v280, %v372
    %v374 = vpop.f32.mrf.mxu0
    %375 = vdwg.mxu0
    %v376 = vlaneseq
    %v377 = vand.u32 %v376, 127
    %vm378 = vcmp.ge.s32.totalorder %v377, 0
    %vm379 = vcmp.lt.s32.totalorder %v377, 8
    %vm380 = vmand %vm378, %vm379
    %v381 = vsel %vm380, %v148, 0.0
    %v382 = vsel %vm380, %v149, 0.0
    %vm383 = vcmp.ge.s32.totalorder %v377, 8
    %vm384 = vcmp.lt.s32.totalorder %v377, 16
    %vm385 = vmand %vm383, %vm384
    %v386 = vsel %vm385, %v148, 0.0
    %v387 = vsel %vm385, %v149, 0.0
    %vm388 = vcmp.ge.s32.totalorder %v377, 16
    %vm389 = vcmp.lt.s32.totalorder %v377, 24
    %vm390 = vmand %vm388, %vm389
    %v391 = vsel %vm390, %v148, 0.0
    %v392 = vsel %vm390, %v149, 0.0
    %vm393 = vcmp.ge.s32.totalorder %v377, 24
    %vm394 = vcmp.lt.s32.totalorder %v377, 32
    %vm395 = vmand %vm393, %vm394
    %v396 = vsel %vm395, %v148, 0.0
    %v397 = vsel %vm395, %v149, 0.0
    %v398 = vsel %vm380, %v348, 0.0
    %v399 = vsel %vm380, %v353, 0.0
    %v400 = vsel %vm380, %v358, 0.0
    %v401 = vsel %vm380, %v363, 0.0
    %v402 = vsel %vm380, %v368, 0.0
    %v403 = vsel %vm380, %v373, 0.0
    %v404 = vsel %vm385, %v348, 0.0
    %v405 = vsel %vm385, %v353, 0.0
    %v406 = vsel %vm385, %v358, 0.0
    %v407 = vsel %vm385, %v363, 0.0
    %v408 = vsel %vm385, %v368, 0.0
    %v409 = vsel %vm385, %v373, 0.0
    %v410 = vsel %vm390, %v348, 0.0
    %v411 = vsel %vm390, %v353, 0.0
    %v412 = vsel %vm390, %v358, 0.0
    %v413 = vsel %vm390, %v363, 0.0
    %v414 = vsel %vm390, %v368, 0.0
    %v415 = vsel %vm390, %v373, 0.0
    %v416 = vsel %vm395, %v348, 0.0
    %v417 = vsel %vm395, %v353, 0.0
    %v418 = vsel %vm395, %v358, 0.0
    %v419 = vsel %vm395, %v363, 0.0
    %v420 = vsel %vm395, %v368, 0.0
    %v421 = vsel %vm395, %v373, 0.0
    %s422 = scalar_lea.vmem [#allocation5], 96
    %v423 = vld [vmem:[%s422] sm:$0xff]
    %v424 = vld [vmem:[%s422 + $0x8] sm:$0xff]
    %v425 = vld [vmem:[%s422 + $0x10] sm:$0xff]
    %v426 = vld [vmem:[%s422 + $0x18] sm:$0xff]
    %v428 = vsel %vm66, %v398, 0
    %v431 = vsel %vm66, %v399, 0
    %v434 = vsel %vm66, %v400, 0
    %v437 = vsel %vm66, %v401, 0
    %v440 = vsel %vm66, %v402, 0
    %v443 = vsel %vm66, %v403, 0
    %v446 = vsel %vm66, %v404, 0
    %v449 = vsel %vm66, %v405, 0
    %v452 = vsel %vm66, %v406, 0
    %v455 = vsel %vm66, %v407, 0
    %v458 = vsel %vm66, %v408, 0
    %v461 = vsel %vm66, %v409, 0
    %v464 = vsel %vm66, %v410, 0
    %v467 = vsel %vm66, %v411, 0
    %v470 = vsel %vm66, %v412, 0
    %v473 = vsel %vm66, %v413, 0
    %v476 = vsel %vm66, %v414, 0
    %v479 = vsel %vm66, %v415, 0
    %v482 = vsel %vm66, %v416, 0
    %v485 = vsel %vm66, %v417, 0
    %v488 = vsel %vm66, %v418, 0
    %v491 = vsel %vm66, %v419, 0
    %v494 = vsel %vm66, %v420, 0
    %v497 = vsel %vm66, %v421, 0
    %499 = vmatprep.subr.mxu0 0.0
    %500 = vmatpush1.msra.mxu0 0.0
    %501 = vmatprep.subr.mxu0 0.0
    %502 = vmatpush1.msra.mxu0 0.0
    %503 = vmatprep.subr.mxu0 0.0
    %504 = vmatpush1.msra.mxu0 0.0
    %505 = vmatprep.subr.mxu0 0.0
    %506 = vmatpush1.msra.mxu0 0.0
    %507 = vmatprep.subr.mxu0 0.0
    %508 = vmatpush1.msra.mxu0 0.0
    %509 = vmatprep.subr.mxu0 0.0
    %510 = vmatpush1.msra.mxu0 0.0
    %511 = vmatprep.subr.mxu0 0.0
    %512 = vmatpush1.msra.mxu0 0.0
    %513 = vmatprep.subr.mxu0 0.0
    %514 = vmatpush1.msra.mxu0 0.0
    %515 = vmatprep.subr.mxu0 0.0
    %516 = vmatpush1.msra.mxu0 0.0
    %517 = vmatprep.subr.mxu0 0.0
    %518 = vmatpush1.msra.mxu0 0.0
    %519 = vmatprep.subr.mxu0 0.0
    %520 = vmatpush1.msra.mxu0 0.0
    %521 = vmatprep.subr.mxu0 0.0
    %522 = vmatpush1.msra.mxu0 0.0
    %523 = vmatprep.subr.mxu0 0.0
    %524 = vmatpush1.msra.mxu0 %v426
    %525 = vmatprep.subr.mxu0 0.0
    %526 = vmatpush1.msra.mxu0 %v425
    %527 = vmatprep.subr.mxu0 0.0
    %528 = vmatpush1.msra.mxu0 %v424
    %529 = vmatprep.subr.mxu0 0.0
    %530 = vmatpush1.msra.mxu0 %v423
    %531 = vmatprep.subr.mxu0 0.0
    %532 = vmatpush2.msra.mxu0 0.0
    %533 = vmatprep.subr.mxu0 0.0
    %534 = vmatpush2.msra.mxu0 0.0
    %535 = vmatprep.subr.mxu0 0.0
    %536 = vmatpush2.msra.mxu0 0.0
    %537 = vmatprep.subr.mxu0 0.0
    %538 = vmatpush2.msra.mxu0 0.0
    %539 = vmatprep.subr.mxu0 0.0
    %540 = vmatpush2.msra.mxu0 0.0
    %541 = vmatprep.subr.mxu0 0.0
    %542 = vmatpush2.msra.mxu0 0.0
    %543 = vmatprep.subr.mxu0 0.0
    %544 = vmatpush2.msra.mxu0 0.0
    %545 = vmatprep.subr.mxu0 0.0
    %546 = vmatpush2.msra.mxu0 0.0
    %547 = vmatprep.subr.mxu0 0.0
    %548 = vmatpush2.msra.mxu0 0.0
    %549 = vmatprep.subr.mxu0 0.0
    %550 = vmatpush2.msra.mxu0 0.0
    %551 = vmatprep.subr.mxu0 0.0
    %552 = vmatpush2.msra.mxu0 0.0
    %553 = vmatprep.subr.mxu0 0.0
    %554 = vmatpush2.msra.mxu0 0.0
    %555 = vmatprep.subr.mxu0 0.0
    %556 = vmatpush2.msra.mxu0 0.0
    %557 = vmatprep.subr.mxu0 0.0
    %558 = vmatpush2.msra.mxu0 0.0
    %559 = vmatprep.subr.mxu0 0.0
    %560 = vmatpush2.msra.mxu0 0.0
    %561 = vmatprep.subr.mxu0 0.0
    %562 = vmatpush2.msra.mxu0 0.0
    %563 = vmatprep.mubr.f32.mxu0 0.0
    %564 = vmatmul.mubr.f32.gmra.mxu0 %v428
    %v565 = vpop.f32.mrf.mxu0
    %v566 = vadd.f32 0.0, %v565
    %v567 = vpop.f32.mrf.mxu0
    %568 = vmatprep.mubr.f32.mxu0 0.0
    %569 = vmatmul.mubr.f32.gmra.mxu0 %v431
    %v570 = vpop.f32.mrf.mxu0
    %v571 = vadd.f32 0.0, %v570
    %v572 = vpop.f32.mrf.mxu0
    %573 = vmatprep.mubr.f32.mxu0 0.0
    %574 = vmatmul.mubr.f32.gmra.mxu0 %v434
    %v575 = vpop.f32.mrf.mxu0
    %v576 = vadd.f32 0.0, %v575
    %v577 = vpop.f32.mrf.mxu0
    %578 = vmatprep.mubr.f32.mxu0 0.0
    %579 = vmatmul.mubr.f32.gmra.mxu0 %v437
    %v580 = vpop.f32.mrf.mxu0
    %v581 = vadd.f32 0.0, %v580
    %v582 = vpop.f32.mrf.mxu0
    %583 = vmatprep.mubr.f32.mxu0 0.0
    %584 = vmatmul.mubr.f32.gmra.mxu0 %v440
    %v585 = vpop.f32.mrf.mxu0
    %v586 = vadd.f32 0.0, %v585
    %v587 = vpop.f32.mrf.mxu0
    %588 = vmatprep.mubr.f32.mxu0 0.0
    %589 = vmatmul.mubr.f32.gmra.mxu0 %v443
    %v590 = vpop.f32.mrf.mxu0
    %v591 = vadd.f32 0.0, %v590
    %v592 = vpop.f32.mrf.mxu0
    %593 = vmatprep.mubr.f32.mxu0 0.0
    %594 = vmatmul.mubr.f32.gmra.mxu0 %v446
    %v595 = vpop.f32.mrf.mxu0
    %v596 = vadd.f32 0.0, %v595
    %v597 = vpop.f32.mrf.mxu0
    %598 = vmatprep.mubr.f32.mxu0 0.0
    %599 = vmatmul.mubr.f32.gmra.mxu0 %v449
    %v600 = vpop.f32.mrf.mxu0
    %v601 = vadd.f32 0.0, %v600
    %v602 = vpop.f32.mrf.mxu0
    %603 = vmatprep.mubr.f32.mxu0 0.0
    %604 = vmatmul.mubr.f32.gmra.mxu0 %v452
    %v605 = vpop.f32.mrf.mxu0
    %v606 = vadd.f32 0.0, %v605
    %v607 = vpop.f32.mrf.mxu0
    %608 = vmatprep.mubr.f32.mxu0 0.0
    %609 = vmatmul.mubr.f32.gmra.mxu0 %v455
    %v610 = vpop.f32.mrf.mxu0
    %v611 = vadd.f32 0.0, %v610
    %v612 = vpop.f32.mrf.mxu0
    %613 = vmatprep.mubr.f32.mxu0 0.0
    %614 = vmatmul.mubr.f32.gmra.mxu0 %v458
    %v615 = vpop.f32.mrf.mxu0
    %v616 = vadd.f32 0.0, %v615
    %v617 = vpop.f32.mrf.mxu0
    %618 = vmatprep.mubr.f32.mxu0 0.0
    %619 = vmatmul.mubr.f32.gmra.mxu0 %v461
    %v620 = vpop.f32.mrf.mxu0
    %v621 = vadd.f32 0.0, %v620
    %v622 = vpop.f32.mrf.mxu0
    %623 = vmatprep.mubr.f32.mxu0 0.0
    %624 = vmatmul.mubr.f32.gmra.mxu0 %v464
    %v625 = vpop.f32.mrf.mxu0
    %v626 = vadd.f32 0.0, %v625
    %v627 = vpop.f32.mrf.mxu0
    %628 = vmatprep.mubr.f32.mxu0 0.0
    %629 = vmatmul.mubr.f32.gmra.mxu0 %v467
    %v630 = vpop.f32.mrf.mxu0
    %v631 = vadd.f32 0.0, %v630
    %v632 = vpop.f32.mrf.mxu0
    %633 = vmatprep.mubr.f32.mxu0 0.0
    %634 = vmatmul.mubr.f32.gmra.mxu0 %v470
    %v635 = vpop.f32.mrf.mxu0
    %v636 = vadd.f32 0.0, %v635
    %v637 = vpop.f32.mrf.mxu0
    %638 = vmatprep.mubr.f32.mxu0 0.0
    %639 = vmatmul.mubr.f32.gmra.mxu0 %v473
    %v640 = vpop.f32.mrf.mxu0
    %v641 = vadd.f32 0.0, %v640
    %v642 = vpop.f32.mrf.mxu0
    %643 = vmatprep.mubr.f32.mxu0 0.0
    %644 = vmatmul.mubr.f32.gmra.mxu0 %v476
    %v645 = vpop.f32.mrf.mxu0
    %v646 = vadd.f32 0.0, %v645
    %v647 = vpop.f32.mrf.mxu0
    %648 = vmatprep.mubr.f32.mxu0 0.0
    %649 = vmatmul.mubr.f32.gmra.mxu0 %v479
    %v650 = vpop.f32.mrf.mxu0
    %v651 = vadd.f32 0.0, %v650
    %v652 = vpop.f32.mrf.mxu0
    %653 = vmatprep.mubr.f32.mxu0 0.0
    %654 = vmatmul.mubr.f32.gmra.mxu0 %v482
    %v655 = vpop.f32.mrf.mxu0
    %v656 = vadd.f32 0.0, %v655
    %v657 = vpop.f32.mrf.mxu0
    %658 = vmatprep.mubr.f32.mxu0 0.0
    %659 = vmatmul.mubr.f32.gmra.mxu0 %v485
    %v660 = vpop.f32.mrf.mxu0
    %v661 = vadd.f32 0.0, %v660
    %v662 = vpop.f32.mrf.mxu0
    %663 = vmatprep.mubr.f32.mxu0 0.0
    %664 = vmatmul.mubr.f32.gmra.mxu0 %v488
    %v665 = vpop.f32.mrf.mxu0
    %v666 = vadd.f32 0.0, %v665
    %v667 = vpop.f32.mrf.mxu0
    %668 = vmatprep.mubr.f32.mxu0 0.0
    %669 = vmatmul.mubr.f32.gmra.mxu0 %v491
    %v670 = vpop.f32.mrf.mxu0
    %v671 = vadd.f32 0.0, %v670
    %v672 = vpop.f32.mrf.mxu0
    %673 = vmatprep.mubr.f32.mxu0 0.0
    %674 = vmatmul.mubr.f32.gmra.mxu0 %v494
    %v675 = vpop.f32.mrf.mxu0
    %v676 = vadd.f32 0.0, %v675
    %v677 = vpop.f32.mrf.mxu0
    %678 = vmatprep.mubr.f32.mxu0 0.0
    %679 = vmatmul.mubr.f32.gmra.mxu0 %v497
    %v680 = vpop.f32.mrf.mxu0
    %v681 = vadd.f32 0.0, %v680
    %v682 = vpop.f32.mrf.mxu0
    %683 = vdwg.mxu0
    %v684 = vlaneseq
    %v685 = vshrl.u32 %v684, 7
    %v686 = vadd.s32 %v685, 8
    %vm687 = vcmp.ge.s32.totalorder %v685, 0
    %vm688 = vcmp.ge.s32.totalorder %v686, 0
    %vm689 = vcmp.lt.s32.totalorder %v685, 8
    %vm690 = vcmp.lt.s32.totalorder %v686, 8
    %vm691 = vmand %vm687, %vm689
    %vm692 = vmand %vm688, %vm690
    %vm693 = vmand %vm691, %vm378
    %vm694 = vmand %vm692, %vm378
    %vm695 = vmand %vm693, %vm379
    %vm696 = vmand %vm694, %vm379
    %vm697 = vcmp.le.s32.totalorder %v377, %v685
    %vm698 = vcmp.le.s32.totalorder %v377, %v686
    %vm699 = vmand %vm695, %vm697
    %vm700 = vmand %vm696, %vm698
    %vm701 = vmand %vm691, %vm383
    %vm702 = vmand %vm692, %vm383
    %vm703 = vmand %vm701, %vm384
    %vm704 = vmand %vm702, %vm384
    %v705 = vsub.s32 %v377, 8
    %vm706 = vcmp.le.s32.totalorder %v705, %v685
    %vm707 = vcmp.le.s32.totalorder %v705, %v686
    %vm708 = vmand %vm703, %vm706
    %vm709 = vmand %vm704, %vm707
    %vm710 = vmand %vm691, %vm388
    %vm711 = vmand %vm692, %vm388
    %vm712 = vmand %vm710, %vm389
    %vm713 = vmand %vm711, %vm389
    %v714 = vsub.s32 %v377, 16
    %vm715 = vcmp.le.s32.totalorder %v714, %v685
    %vm716 = vcmp.le.s32.totalorder %v714, %v686
    %vm717 = vmand %vm712, %vm715
    %vm718 = vmand %vm713, %vm716
    %vm719 = vcmp.ge.s32.totalorder %v685, 8
    %vm720 = vcmp.ge.s32.totalorder %v686, 8
    %vm721 = vcmp.lt.s32.totalorder %v685, 16
    %vm722 = vcmp.lt.s32.totalorder %v686, 16
    %vm723 = vmand %vm719, %vm721
    %vm724 = vmand %vm720, %vm722
    %vm725 = vmand %vm723, %vm393
    %vm726 = vmand %vm724, %vm393
    %vm727 = vmand %vm725, %vm394
    %vm728 = vmand %vm726, %vm394
    %v729 = vsub.s32 %v377, 24
    %v730 = vsub.s32 %v685, 8
    %vm731 = vcmp.le.s32.totalorder %v729, %v730
    %vm732 = vcmp.le.s32.totalorder %v729, %v685
    %vm733 = vmand %vm727, %vm731
    %vm734 = vmand %vm728, %vm732
    %vm735 = vcmp.ge.s32.totalorder %v377, 32
    %vm736 = vmand %vm723, %vm735
    %vm737 = vmand %vm724, %vm735
    %vm738 = vcmp.lt.s32.totalorder %v377, 40
    %vm739 = vmand %vm736, %vm738
    %vm740 = vmand %vm737, %vm738
    %v741 = vsub.s32 %v377, 32
    %vm742 = vcmp.le.s32.totalorder %v741, %v730
    %vm743 = vcmp.le.s32.totalorder %v741, %v685
    %vm744 = vmand %vm739, %vm742
    %vm745 = vmand %vm740, %vm743
    %vm746 = vcmp.ge.s32.totalorder %v377, 40
    %vm747 = vmand %vm723, %vm746
    %vm748 = vmand %vm724, %vm746
    %vm749 = vcmp.lt.s32.totalorder %v377, 48
    %vm750 = vmand %vm747, %vm749
    %vm751 = vmand %vm748, %vm749
    %v752 = vsub.s32 %v377, 40
    %vm753 = vcmp.le.s32.totalorder %v752, %v730
    %vm754 = vcmp.le.s32.totalorder %v752, %v685
    %vm755 = vmand %vm750, %vm753
    %vm756 = vmand %vm751, %vm754
    %vm757 = vmor %vm699, %vm708
    %vm758 = vmor %vm700, %vm709
    %vm759 = vmor %vm757, %vm717
    %vm760 = vmor %vm758, %vm718
    %vm761 = vmor %vm759, %vm733
    %vm762 = vmor %vm760, %vm734
    %vm763 = vmor %vm761, %vm744
    %vm764 = vmor %vm762, %vm745
    %vm765 = vmor %vm763, %vm755
    %vm766 = vmor %vm764, %vm756
    %v767 = vsel %vm765, 0.0, -1e+30
    %v768 = vsel %vm766, 0.0, -1e+30
    %v770 = vsel %vm66, %v381, 0
    %v773 = vsel %vm66, %v382, 0
    %v776 = vsel %vm66, %v386, 0
    %v779 = vsel %vm66, %v387, 0
    %v782 = vsel %vm66, %v391, 0
    %v785 = vsel %vm66, %v392, 0
    %v788 = vsel %vm66, %v396, 0
    %v791 = vsel %vm66, %v397, 0
    %v794 = vsel %vm66, %v244, 0
    %v797 = vsel %vm66, %v249, 0
    %v800 = vsel %vm66, %v254, 0
    %v803 = vsel %vm66, %v259, 0
    %v806 = vsel %vm66, %v264, 0
    %v809 = vsel %vm66, %v269, 0
    %811 = vmatprep.subr.mxu0 0.0
    %812 = vmatpush1.xpose.msra.mxu0 0.0
    %813 = vmatprep.subr.mxu0 0.0
    %814 = vmatpush1.xpose.msra.mxu0 0.0
    %815 = vmatprep.subr.mxu0 0.0
    %816 = vmatpush1.xpose.msra.mxu0 0.0
    %817 = vmatprep.subr.mxu0 0.0
    %818 = vmatpush1.xpose.msra.mxu0 0.0
    %819 = vmatprep.subr.mxu0 0.0
    %820 = vmatpush1.xpose.msra.mxu0 0.0
    %821 = vmatprep.subr.mxu0 0.0
    %822 = vmatpush1.xpose.msra.mxu0 0.0
    %823 = vmatprep.subr.mxu0 0.0
    %824 = vmatpush1.xpose.msra.mxu0 0.0
    %825 = vmatprep.subr.mxu0 0.0
    %826 = vmatpush1.xpose.msra.mxu0 0.0
    %827 = vmatprep.subr.mxu0 0.0
    %828 = vmatpush1.xpose.msra.mxu0 0.0
    %829 = vmatprep.subr.mxu0 0.0
    %830 = vmatpush1.xpose.msra.mxu0 0.0
    %831 = vmatprep.subr.mxu0 0.0
    %832 = vmatpush1.xpose.msra.mxu0 %v809
    %833 = vmatprep.subr.mxu0 0.0
    %834 = vmatpush1.xpose.msra.mxu0 %v806
    %835 = vmatprep.subr.mxu0 0.0
    %836 = vmatpush1.xpose.msra.mxu0 %v803
    %837 = vmatprep.subr.mxu0 0.0
    %838 = vmatpush1.xpose.msra.mxu0 %v800
    %839 = vmatprep.subr.mxu0 0.0
    %840 = vmatpush1.xpose.msra.mxu0 %v797
    %841 = vmatprep.subr.mxu0 0.0
    %842 = vmatpush1.xpose.msra.mxu0 %v794
    %843 = vmatprep.subr.mxu0 0.0
    %844 = vmatpush2.xpose.msra.mxu0 0.0
    %845 = vmatprep.subr.mxu0 0.0
    %846 = vmatpush2.xpose.msra.mxu0 0.0
    %847 = vmatprep.subr.mxu0 0.0
    %848 = vmatpush2.xpose.msra.mxu0 0.0
    %849 = vmatprep.subr.mxu0 0.0
    %850 = vmatpush2.xpose.msra.mxu0 0.0
    %851 = vmatprep.subr.mxu0 0.0
    %852 = vmatpush2.xpose.msra.mxu0 0.0
    %853 = vmatprep.subr.mxu0 0.0
    %854 = vmatpush2.xpose.msra.mxu0 0.0
    %855 = vmatprep.subr.mxu0 0.0
    %856 = vmatpush2.xpose.msra.mxu0 0.0
    %857 = vmatprep.subr.mxu0 0.0
    %858 = vmatpush2.xpose.msra.mxu0 0.0
    %859 = vmatprep.subr.mxu0 0.0
    %860 = vmatpush2.xpose.msra.mxu0 0.0
    %861 = vmatprep.subr.mxu0 0.0
    %862 = vmatpush2.xpose.msra.mxu0 0.0
    %863 = vmatprep.subr.mxu0 0.0
    %864 = vmatpush2.xpose.msra.mxu0 0.0
    %865 = vmatprep.subr.mxu0 0.0
    %866 = vmatpush2.xpose.msra.mxu0 0.0
    %867 = vmatprep.subr.mxu0 0.0
    %868 = vmatpush2.xpose.msra.mxu0 0.0
    %869 = vmatprep.subr.mxu0 0.0
    %870 = vmatpush2.xpose.msra.mxu0 0.0
    %871 = vmatprep.subr.mxu0 0.0
    %872 = vmatpush2.xpose.msra.mxu0 0.0
    %873 = vmatprep.subr.mxu0 0.0
    %874 = vmatpush2.xpose.msra.mxu0 0.0
    %875 = vmatprep.mubr.f32.mxu0 0.0
    %876 = vmatmul.mubr.f32.gmra.mxu0 %v770
    %v877 = vpop.f32.mrf.mxu0
    %v878 = vadd.f32 %v767, %v877
    %v879 = vpop.f32.mrf.mxu0
    %880 = vmatprep.mubr.f32.mxu0 0.0
    %881 = vmatmul.mubr.f32.gmra.mxu0 %v773
    %v882 = vpop.f32.mrf.mxu0
    %v883 = vadd.f32 %v768, %v882
    %v884 = vpop.f32.mrf.mxu0
    %885 = vmatprep.mubr.f32.mxu0 0.0
    %886 = vmatmul.mubr.f32.gmra.mxu0 %v776
    %v887 = vpop.f32.mrf.mxu0
    %v888 = vadd.f32 %v767, %v887
    %v889 = vpop.f32.mrf.mxu0
    %890 = vmatprep.mubr.f32.mxu0 0.0
    %891 = vmatmul.mubr.f32.gmra.mxu0 %v779
    %v892 = vpop.f32.mrf.mxu0
    %v893 = vadd.f32 %v768, %v892
    %v894 = vpop.f32.mrf.mxu0
    %895 = vmatprep.mubr.f32.mxu0 0.0
    %896 = vmatmul.mubr.f32.gmra.mxu0 %v782
    %v897 = vpop.f32.mrf.mxu0
    %v898 = vadd.f32 %v767, %v897
    %v899 = vpop.f32.mrf.mxu0
    %900 = vmatprep.mubr.f32.mxu0 0.0
    %901 = vmatmul.mubr.f32.gmra.mxu0 %v785
    %v902 = vpop.f32.mrf.mxu0
    %v903 = vadd.f32 %v768, %v902
    %v904 = vpop.f32.mrf.mxu0
    %905 = vmatprep.mubr.f32.mxu0 0.0
    %906 = vmatmul.mubr.f32.gmra.mxu0 %v788
    %v907 = vpop.f32.mrf.mxu0
    %v908 = vadd.f32 %v767, %v907
    %v909 = vpop.f32.mrf.mxu0
    %910 = vmatprep.mubr.f32.mxu0 0.0
    %911 = vmatmul.mubr.f32.gmra.mxu0 %v791
    %v912 = vpop.f32.mrf.mxu0
    %v913 = vadd.f32 %v768, %v912
    %v914 = vpop.f32.mrf.mxu0
    %915 = vdwg.mxu0
    %vm916 = vcmask 392192
    %v917 = vsel %vm916, %v878, -inf
    %918 = vmax.xlane.f32.xlu0 %v917
    %v919 = vpop.xlane.xlu0 %918
    %v920 = vsel %vm916, %v883, -inf
    %921 = vmax.xlane.f32.xlu0 %v920
    %v922 = vpop.xlane.xlu0 %921
    %v923 = vsel %vm916, %v888, -inf
    %924 = vmax.xlane.f32.xlu0 %v923
    %v925 = vpop.xlane.xlu0 %924
    %v926 = vsel %vm916, %v893, -inf
    %927 = vmax.xlane.f32.xlu0 %v926
    %v928 = vpop.xlane.xlu0 %927
    %v929 = vsel %vm916, %v898, -inf
    %930 = vmax.xlane.f32.xlu0 %v929
    %v931 = vpop.xlane.xlu0 %930
    %v932 = vsel %vm916, %v903, -inf
    %933 = vmax.xlane.f32.xlu0 %v932
    %v934 = vpop.xlane.xlu0 %933
    %v935 = vsel %vm916, %v908, -inf
    %936 = vmax.xlane.f32.xlu0 %v935
    %v937 = vpop.xlane.xlu0 %936
    %v938 = vsel %vm916, %v913, -inf
    %939 = vmax.xlane.f32.xlu0 %v938
    %v940 = vpop.xlane.xlu0 %939
    %v941 = vsub.f32 %v878, %v919
    %v942 = vsub.f32 %v883, %v922
    %v943 = vsub.f32 %v888, %v925
    %v944 = vsub.f32 %v893, %v928
    %v945 = vsub.f32 %v898, %v931
    %v946 = vsub.f32 %v903, %v934
    %v947 = vsub.f32 %v908, %v937
    %v948 = vsub.f32 %v913, %v940
    %v949 = vmul.f32 %v941, 1.442695
    %v950 = vpow.pop %v949
    %v951 = vmul.f32 %v942, 1.442695
    %v952 = vpow.pop %v951
    %v953 = vmul.f32 %v943, 1.442695
    %v954 = vpow.pop %v953
    %v955 = vmul.f32 %v944, 1.442695
    %v956 = vpow.pop %v955
    %v957 = vmul.f32 %v945, 1.442695
    %v958 = vpow.pop %v957
    %v959 = vmul.f32 %v946, 1.442695
    %v960 = vpow.pop %v959
    %v961 = vmul.f32 %v947, 1.442695
    %v962 = vpow.pop %v961
    %v963 = vmul.f32 %v948, 1.442695
    %v964 = vpow.pop %v963
    %v965 = vsel %vm916, %v950, 0.0
    %966 = vadd.xlane.f32.xlu0 %v965
    %v967 = vpop.xlane.xlu0 %966
    %v968 = vsel %vm916, %v952, 0.0
    %969 = vadd.xlane.f32.xlu0 %v968
    %v970 = vpop.xlane.xlu0 %969
    %v971 = vsel %vm916, %v954, 0.0
    %972 = vadd.xlane.f32.xlu0 %v971
    %v973 = vpop.xlane.xlu0 %972
    %v974 = vsel %vm916, %v956, 0.0
    %975 = vadd.xlane.f32.xlu0 %v974
    %v976 = vpop.xlane.xlu0 %975
    %v977 = vsel %vm916, %v958, 0.0
    %978 = vadd.xlane.f32.xlu0 %v977
    %v979 = vpop.xlane.xlu0 %978
    %v980 = vsel %vm916, %v960, 0.0
    %981 = vadd.xlane.f32.xlu0 %v980
    %v982 = vpop.xlane.xlu0 %981
    %v983 = vsel %vm916, %v962, 0.0
    %984 = vadd.xlane.f32.xlu0 %v983
    %v985 = vpop.xlane.xlu0 %984
    %v986 = vsel %vm916, %v964, 0.0
    %987 = vadd.xlane.f32.xlu0 %v986
    %v988 = vpop.xlane.xlu0 %987
    %v989 = vrcp.pop %v967
    %v990 = vrcp.pop %v970
    %v991 = vrcp.pop %v973
    %v992 = vrcp.pop %v976
    %v993 = vrcp.pop %v979
    %v994 = vrcp.pop %v982
    %v995 = vrcp.pop %v985
    %v996 = vrcp.pop %v988
    %v997 = vmul.f32 %v950, %v989
    %v998 = vmul.f32 %v952, %v990
    %v999 = vmul.f32 %v954, %v991
    %v1000 = vmul.f32 %v956, %v992
    %v1001 = vmul.f32 %v958, %v993
    %v1002 = vmul.f32 %v960, %v994
    %v1003 = vmul.f32 %v962, %v995
    %v1004 = vmul.f32 %v964, %v996
    %v1006 = vsel %vm916, %v999, 0
    %v1009 = vsel %vm916, %v1000, 0
    %1011 = vmatprep.subr.mxu0 0.0
    %1012 = vmatpush1.msra.mxu0 0.0
    %1013 = vmatprep.subr.mxu0 0.0
    %1014 = vmatpush1.msra.mxu0 0.0
    %1015 = vmatprep.subr.mxu0 0.0
    %1016 = vmatpush1.msra.mxu0 0.0
    %1017 = vmatprep.subr.mxu0 0.0
    %1018 = vmatpush1.msra.mxu0 0.0
    %1019 = vmatprep.subr.mxu0 0.0
    %1020 = vmatpush1.msra.mxu0 0.0
    %1021 = vmatprep.subr.mxu0 0.0
    %1022 = vmatpush1.msra.mxu0 0.0
    %1023 = vmatprep.subr.mxu0 0.0
    %1024 = vmatpush1.msra.mxu0 0.0
    %1025 = vmatprep.subr.mxu0 0.0
    %1026 = vmatpush1.msra.mxu0 0.0
    %1027 = vmatprep.subr.mxu0 0.0
    %1028 = vmatpush1.msra.mxu0 0.0
    %1029 = vmatprep.subr.mxu0 0.0
    %1030 = vmatpush1.msra.mxu0 0.0
    %1031 = vmatprep.subr.mxu0 0.0
    %1032 = vmatpush1.msra.mxu0 %v621
    %1033 = vmatprep.subr.mxu0 0.0
    %1034 = vmatpush1.msra.mxu0 %v616
    %1035 = vmatprep.subr.mxu0 0.0
    %1036 = vmatpush1.msra.mxu0 %v611
    %1037 = vmatprep.subr.mxu0 0.0
    %1038 = vmatpush1.msra.mxu0 %v606
    %1039 = vmatprep.subr.mxu0 0.0
    %1040 = vmatpush1.msra.mxu0 %v601
    %1041 = vmatprep.subr.mxu0 0.0
    %1042 = vmatpush1.msra.mxu0 %v596
    %1043 = vmatprep.subr.mxu0 0.0
    %1044 = vmatpush2.msra.mxu0 0.0
    %1045 = vmatprep.subr.mxu0 0.0
    %1046 = vmatpush2.msra.mxu0 0.0
    %1047 = vmatprep.subr.mxu0 0.0
    %1048 = vmatpush2.msra.mxu0 0.0
    %1049 = vmatprep.subr.mxu0 0.0
    %1050 = vmatpush2.msra.mxu0 0.0
    %1051 = vmatprep.subr.mxu0 0.0
    %1052 = vmatpush2.msra.mxu0 0.0
    %1053 = vmatprep.subr.mxu0 0.0
    %1054 = vmatpush2.msra.mxu0 0.0
    %1055 = vmatprep.subr.mxu0 0.0
    %1056 = vmatpush2.msra.mxu0 0.0
    %1057 = vmatprep.subr.mxu0 0.0
    %1058 = vmatpush2.msra.mxu0 0.0
    %1059 = vmatprep.subr.mxu0 0.0
    %1060 = vmatpush2.msra.mxu0 0.0
    %1061 = vmatprep.subr.mxu0 0.0
    %1062 = vmatpush2.msra.mxu0 0.0
    %1063 = vmatprep.subr.mxu0 0.0
    %1064 = vmatpush2.msra.mxu0 0.0
    %1065 = vmatprep.subr.mxu0 0.0
    %1066 = vmatpush2.msra.mxu0 0.0
    %1067 = vmatprep.subr.mxu0 0.0
    %1068 = vmatpush2.msra.mxu0 0.0
    %1069 = vmatprep.subr.mxu0 0.0
    %1070 = vmatpush2.msra.mxu0 0.0
    %1071 = vmatprep.subr.mxu0 0.0
    %1072 = vmatpush2.msra.mxu0 0.0
    %1073 = vmatprep.subr.mxu0 0.0
    %1074 = vmatpush2.msra.mxu0 0.0
    %1075 = vmatprep.mubr.f32.mxu0 0.0
    %1076 = vmatmul.mubr.f32.gmra.mxu0 %v1006
    %v1077 = vpop.f32.mrf.mxu0
    %v1078 = vadd.f32 0.0, %v1077
    %v1079 = vpop.f32.mrf.mxu0
    %1080 = vmatprep.mubr.f32.mxu0 0.0
    %1081 = vmatmul.mubr.f32.gmra.mxu0 %v1009
    %v1082 = vpop.f32.mrf.mxu0
    %v1083 = vadd.f32 0.0, %v1082
    %v1084 = vpop.f32.mrf.mxu0
    %1085 = vdwg.mxu0
    %v1087 = vsel %vm916, %v997, 0
    %v1090 = vsel %vm916, %v998, 0
    %1092 = vmatprep.subr.mxu0 0.0
    %1093 = vmatpush1.msra.mxu0 0.0
    %1094 = vmatprep.subr.mxu0 0.0
    %1095 = vmatpush1.msra.mxu0 0.0
    %1096 = vmatprep.subr.mxu0 0.0
    %1097 = vmatpush1.msra.mxu0 0.0
    %1098 = vmatprep.subr.mxu0 0.0
    %1099 = vmatpush1.msra.mxu0 0.0
    %1100 = vmatprep.subr.mxu0 0.0
    %1101 = vmatpush1.msra.mxu0 0.0
    %1102 = vmatprep.subr.mxu0 0.0
    %1103 = vmatpush1.msra.mxu0 0.0
    %1104 = vmatprep.subr.mxu0 0.0
    %1105 = vmatpush1.msra.mxu0 0.0
    %1106 = vmatprep.subr.mxu0 0.0
    %1107 = vmatpush1.msra.mxu0 0.0
    %1108 = vmatprep.subr.mxu0 0.0
    %1109 = vmatpush1.msra.mxu0 0.0
    %1110 = vmatprep.subr.mxu0 0.0
    %1111 = vmatpush1.msra.mxu0 0.0
    %1112 = vmatprep.subr.mxu0 0.0
    %1113 = vmatpush1.msra.mxu0 %v591
    %1114 = vmatprep.subr.mxu0 0.0
    %1115 = vmatpush1.msra.mxu0 %v586
    %1116 = vmatprep.subr.mxu0 0.0
    %1117 = vmatpush1.msra.mxu0 %v581
    %1118 = vmatprep.subr.mxu0 0.0
    %1119 = vmatpush1.msra.mxu0 %v576
    %1120 = vmatprep.subr.mxu0 0.0
    %1121 = vmatpush1.msra.mxu0 %v571
    %1122 = vmatprep.subr.mxu0 0.0
    %1123 = vmatpush1.msra.mxu0 %v566
    %1124 = vmatprep.subr.mxu0 0.0
    %1125 = vmatpush2.msra.mxu0 0.0
    %1126 = vmatprep.subr.mxu0 0.0
    %1127 = vmatpush2.msra.mxu0 0.0
    %1128 = vmatprep.subr.mxu0 0.0
    %1129 = vmatpush2.msra.mxu0 0.0
    %1130 = vmatprep.subr.mxu0 0.0
    %1131 = vmatpush2.msra.mxu0 0.0
    %1132 = vmatprep.subr.mxu0 0.0
    %1133 = vmatpush2.msra.mxu0 0.0
    %1134 = vmatprep.subr.mxu0 0.0
    %1135 = vmatpush2.msra.mxu0 0.0
    %1136 = vmatprep.subr.mxu0 0.0
    %1137 = vmatpush2.msra.mxu0 0.0
    %1138 = vmatprep.subr.mxu0 0.0
    %1139 = vmatpush2.msra.mxu0 0.0
    %1140 = vmatprep.subr.mxu0 0.0
    %1141 = vmatpush2.msra.mxu0 0.0
    %1142 = vmatprep.subr.mxu0 0.0
    %1143 = vmatpush2.msra.mxu0 0.0
    %1144 = vmatprep.subr.mxu0 0.0
    %1145 = vmatpush2.msra.mxu0 0.0
    %1146 = vmatprep.subr.mxu0 0.0
    %1147 = vmatpush2.msra.mxu0 0.0
    %1148 = vmatprep.subr.mxu0 0.0
    %1149 = vmatpush2.msra.mxu0 0.0
    %1150 = vmatprep.subr.mxu0 0.0
    %1151 = vmatpush2.msra.mxu0 0.0
    %1152 = vmatprep.subr.mxu0 0.0
    %1153 = vmatpush2.msra.mxu0 0.0
    %1154 = vmatprep.subr.mxu0 0.0
    %1155 = vmatpush2.msra.mxu0 0.0
    %1156 = vmatprep.mubr.f32.mxu0 0.0
    %1157 = vmatmul.mubr.f32.gmra.mxu0 %v1087
    %v1158 = vpop.f32.mrf.mxu0
    %v1159 = vadd.f32 %v1078, %v1158
    %v1160 = vpop.f32.mrf.mxu0
    %1161 = vmatprep.mubr.f32.mxu0 0.0
    %1162 = vmatmul.mubr.f32.gmra.mxu0 %v1090
    %v1163 = vpop.f32.mrf.mxu0
    %v1164 = vadd.f32 %v1083, %v1163
    %v1165 = vpop.f32.mrf.mxu0
    %1166 = vdwg.mxu0
    %v1168 = vsel %vm916, %v1001, 0
    %v1171 = vsel %vm916, %v1002, 0
    %1173 = vmatprep.subr.mxu0 0.0
    %1174 = vmatpush1.msra.mxu0 0.0
    %1175 = vmatprep.subr.mxu0 0.0
    %1176 = vmatpush1.msra.mxu0 0.0
    %1177 = vmatprep.subr.mxu0 0.0
    %1178 = vmatpush1.msra.mxu0 0.0
    %1179 = vmatprep.subr.mxu0 0.0
    %1180 = vmatpush1.msra.mxu0 0.0
    %1181 = vmatprep.subr.mxu0 0.0
    %1182 = vmatpush1.msra.mxu0 0.0
    %1183 = vmatprep.subr.mxu0 0.0
    %1184 = vmatpush1.msra.mxu0 0.0
    %1185 = vmatprep.subr.mxu0 0.0
    %1186 = vmatpush1.msra.mxu0 0.0
    %1187 = vmatprep.subr.mxu0 0.0
    %1188 = vmatpush1.msra.mxu0 0.0
    %1189 = vmatprep.subr.mxu0 0.0
    %1190 = vmatpush1.msra.mxu0 0.0
    %1191 = vmatprep.subr.mxu0 0.0
    %1192 = vmatpush1.msra.mxu0 0.0
    %1193 = vmatprep.subr.mxu0 0.0
    %1194 = vmatpush1.msra.mxu0 %v651
    %1195 = vmatprep.subr.mxu0 0.0
    %1196 = vmatpush1.msra.mxu0 %v646
    %1197 = vmatprep.subr.mxu0 0.0
    %1198 = vmatpush1.msra.mxu0 %v641
    %1199 = vmatprep.subr.mxu0 0.0
    %1200 = vmatpush1.msra.mxu0 %v636
    %1201 = vmatprep.subr.mxu0 0.0
    %1202 = vmatpush1.msra.mxu0 %v631
    %1203 = vmatprep.subr.mxu0 0.0
    %1204 = vmatpush1.msra.mxu0 %v626
    %1205 = vmatprep.subr.mxu0 0.0
    %1206 = vmatpush2.msra.mxu0 0.0
    %1207 = vmatprep.subr.mxu0 0.0
    %1208 = vmatpush2.msra.mxu0 0.0
    %1209 = vmatprep.subr.mxu0 0.0
    %1210 = vmatpush2.msra.mxu0 0.0
    %1211 = vmatprep.subr.mxu0 0.0
    %1212 = vmatpush2.msra.mxu0 0.0
    %1213 = vmatprep.subr.mxu0 0.0
    %1214 = vmatpush2.msra.mxu0 0.0
    %1215 = vmatprep.subr.mxu0 0.0
    %1216 = vmatpush2.msra.mxu0 0.0
    %1217 = vmatprep.subr.mxu0 0.0
    %1218 = vmatpush2.msra.mxu0 0.0
    %1219 = vmatprep.subr.mxu0 0.0
    %1220 = vmatpush2.msra.mxu0 0.0
    %1221 = vmatprep.subr.mxu0 0.0
    %1222 = vmatpush2.msra.mxu0 0.0
    %1223 = vmatprep.subr.mxu0 0.0
    %1224 = vmatpush2.msra.mxu0 0.0
    %1225 = vmatprep.subr.mxu0 0.0
    %1226 = vmatpush2.msra.mxu0 0.0
    %1227 = vmatprep.subr.mxu0 0.0
    %1228 = vmatpush2.msra.mxu0 0.0
    %1229 = vmatprep.subr.mxu0 0.0
    %1230 = vmatpush2.msra.mxu0 0.0
    %1231 = vmatprep.subr.mxu0 0.0
    %1232 = vmatpush2.msra.mxu0 0.0
    %1233 = vmatprep.subr.mxu0 0.0
    %1234 = vmatpush2.msra.mxu0 0.0
    %1235 = vmatprep.subr.mxu0 0.0
    %1236 = vmatpush2.msra.mxu0 0.0
    %1237 = vmatprep.mubr.f32.mxu0 0.0
    %1238 = vmatmul.mubr.f32.gmra.mxu0 %v1168
    %v1239 = vpop.f32.mrf.mxu0
    %v1240 = vadd.f32 0.0, %v1239
    %v1241 = vpop.f32.mrf.mxu0
    %1242 = vmatprep.mubr.f32.mxu0 0.0
    %1243 = vmatmul.mubr.f32.gmra.mxu0 %v1171
    %v1244 = vpop.f32.mrf.mxu0
    %v1245 = vadd.f32 0.0, %v1244
    %v1246 = vpop.f32.mrf.mxu0
    %1247 = vdwg.mxu0
    %v1248 = vadd.f32 %v1159, %v1240
    %v1249 = vadd.f32 %v1164, %v1245
    %v1251 = vsel %vm916, %v1003, 0
    %v1254 = vsel %vm916, %v1004, 0
    %1256 = vmatprep.subr.mxu0 0.0
    %1257 = vmatpush1.msra.mxu0 0.0
    %1258 = vmatprep.subr.mxu0 0.0
    %1259 = vmatpush1.msra.mxu0 0.0
    %1260 = vmatprep.subr.mxu0 0.0
    %1261 = vmatpush1.msra.mxu0 0.0
    %1262 = vmatprep.subr.mxu0 0.0
    %1263 = vmatpush1.msra.mxu0 0.0
    %1264 = vmatprep.subr.mxu0 0.0
    %1265 = vmatpush1.msra.mxu0 0.0
    %1266 = vmatprep.subr.mxu0 0.0
    %1267 = vmatpush1.msra.mxu0 0.0
    %1268 = vmatprep.subr.mxu0 0.0
    %1269 = vmatpush1.msra.mxu0 0.0
    %1270 = vmatprep.subr.mxu0 0.0
    %1271 = vmatpush1.msra.mxu0 0.0
    %1272 = vmatprep.subr.mxu0 0.0
    %1273 = vmatpush1.msra.mxu0 0.0
    %1274 = vmatprep.subr.mxu0 0.0
    %1275 = vmatpush1.msra.mxu0 0.0
    %1276 = vmatprep.subr.mxu0 0.0
    %1277 = vmatpush1.msra.mxu0 %v681
    %1278 = vmatprep.subr.mxu0 0.0
    %1279 = vmatpush1.msra.mxu0 %v676
    %1280 = vmatprep.subr.mxu0 0.0
    %1281 = vmatpush1.msra.mxu0 %v671
    %1282 = vmatprep.subr.mxu0 0.0
    %1283 = vmatpush1.msra.mxu0 %v666
    %1284 = vmatprep.subr.mxu0 0.0
    %1285 = vmatpush1.msra.mxu0 %v661
    %1286 = vmatprep.subr.mxu0 0.0
    %1287 = vmatpush1.msra.mxu0 %v656
    %1288 = vmatprep.subr.mxu0 0.0
    %1289 = vmatpush2.msra.mxu0 0.0
    %1290 = vmatprep.subr.mxu0 0.0
    %1291 = vmatpush2.msra.mxu0 0.0
    %1292 = vmatprep.subr.mxu0 0.0
    %1293 = vmatpush2.msra.mxu0 0.0
    %1294 = vmatprep.subr.mxu0 0.0
    %1295 = vmatpush2.msra.mxu0 0.0
    %1296 = vmatprep.subr.mxu0 0.0
    %1297 = vmatpush2.msra.mxu0 0.0
    %1298 = vmatprep.subr.mxu0 0.0
    %1299 = vmatpush2.msra.mxu0 0.0
    %1300 = vmatprep.subr.mxu0 0.0
    %1301 = vmatpush2.msra.mxu0 0.0
    %1302 = vmatprep.subr.mxu0 0.0
    %1303 = vmatpush2.msra.mxu0 0.0
    %1304 = vmatprep.subr.mxu0 0.0
    %1305 = vmatpush2.msra.mxu0 0.0
    %1306 = vmatprep.subr.mxu0 0.0
    %1307 = vmatpush2.msra.mxu0 0.0
    %1308 = vmatprep.subr.mxu0 0.0
    %1309 = vmatpush2.msra.mxu0 0.0
    %1310 = vmatprep.subr.mxu0 0.0
    %1311 = vmatpush2.msra.mxu0 0.0
    %1312 = vmatprep.subr.mxu0 0.0
    %1313 = vmatpush2.msra.mxu0 0.0
    %1314 = vmatprep.subr.mxu0 0.0
    %1315 = vmatpush2.msra.mxu0 0.0
    %1316 = vmatprep.subr.mxu0 0.0
    %1317 = vmatpush2.msra.mxu0 0.0
    %1318 = vmatprep.subr.mxu0 0.0
    %1319 = vmatpush2.msra.mxu0 0.0
    %1320 = vmatprep.mubr.f32.mxu0 0.0
    %1321 = vmatmul.mubr.f32.gmra.mxu0 %v1251
    %v1322 = vpop.f32.mrf.mxu0
    %v1323 = vadd.f32 0.0, %v1322
    %v1324 = vpop.f32.mrf.mxu0
    %1325 = vmatprep.mubr.f32.mxu0 0.0
    %1326 = vmatmul.mubr.f32.gmra.mxu0 %v1254
    %v1327 = vpop.f32.mrf.mxu0
    %v1328 = vadd.f32 0.0, %v1327
    %v1329 = vpop.f32.mrf.mxu0
    %1330 = vdwg.mxu0
    %v1331 = vadd.f32 %v1248, %v1323
    %v1332 = vadd.f32 %v1249, %v1328
    %v1333 = vlaneseq
    %v1334 = vshrl.u32 %v1333, 7
    %v1335 = vsub.s32 3, %v1334
    %v1336 = vrot.slane %v57, %v1335
    %v1337 = vadd.f32 %v1331, %v1336
    %v1338 = vadd.f32 %v1332, %v1336
    %v1339 = vadd.f32 %v49, %v1337
    %v1340 = vadd.f32 %v50, %v1338
    %v1341 = vsel %vm66, %v1339, 0.0
    %1342 = vadd.xlane.f32.xlu0 %v1341
    %v1343 = vpop.xlane.xlu0 %1342
    %v1344 = vsel %vm66, %v1340, 0.0
    %1345 = vadd.xlane.f32.xlu0 %v1344
    %v1346 = vpop.xlane.xlu0 %1345
    %v1347 = vrcp.pop 32.0
    %v1348 = vmul.f32 %v1343, %v1347
    %v1349 = vmul.f32 %v1346, %v1347
    %v1350 = vsub.f32 %v1339, %v1348
    %v1351 = vsub.f32 %v1340, %v1349
    %v1352 = vmul.f32 %v1350, %v1350
    %v1353 = vmul.f32 %v1351, %v1351
    %v1354 = vsel %vm66, %v1352, 0.0
    %1355 = vadd.xlane.f32.xlu0 %v1354
    %v1356 = vpop.xlane.xlu0 %1355
    %v1357 = vsel %vm66, %v1353, 0.0
    %1358 = vadd.xlane.f32.xlu0 %v1357
    %v1359 = vpop.xlane.xlu0 %1358
    %v1360 = vmul.f32 %v1356, %v1347
    %v1361 = vmul.f32 %v1359, %v1347
    %v1362 = vadd.f32 %v1360, 1e-05
    %v1363 = vadd.f32 %v1361, 1e-05
    %v1364 = vrsqrt.pop %v1362
    %v1365 = vrsqrt.pop %v1363
    %v1366 = vmul.f32 %v1350, %v1364
    %v1367 = vmul.f32 %v1351, %v1365
    %v1368 = vlaneseq
    %v1369 = vshrl.u32 %v1368, 7
    %v1370 = vsub.s32 4, %v1369
    %v1371 = vrot.slane %v57, %v1370
    %v1372 = vmul.f32 %v1366, %v1371
    %v1373 = vmul.f32 %v1367, %v1371
    %v1374 = vlaneseq
    %v1375 = vshrl.u32 %v1374, 7
    %v1376 = vsub.s32 5, %v1375
    %v1377 = vrot.slane %v57, %v1376
    %v1378 = vadd.f32 %v1372, %v1377
    %v1379 = vadd.f32 %v1373, %v1377
    %v1380 = vld [vmem:[%s2] sm:$0xff]
    %v1381 = vld [vmem:[%s2 + $0x8] sm:$0xff]
    %1383 = vset.pattern.permute.xlu0 0
    %1384 = vperm.xlu0 %1383, %v1380
    %v1385 = vpop.permute.xlu0 %1384
    %1388 = vset.pattern.permute.xlu0 0
    %1389 = vperm.xlu0 %1388, %v1381
    %v1390 = vpop.permute.xlu0 %1389
    %v1392 = vmul.f32 %v1378, %v1385
    %v1393 = vmul.f32 %v1379, %v1390
    %1394 = vst.msk [vmem:[#allocation7] sm:$0xff] %vm66, %v1392
    %1395 = vst.msk [vmem:[#allocation7 + $0x8] sm:$0xff] %vm66, %v1393
    // Predicated region
    $region30: #{tpu_custom_call.1} parent=1 // pred_check
      _
    $region31: #{tpu_custom_call.1} parent=1 // pred_check_branch
      %1397 = sbr.rel (0) target = $region33
    $region32: #{tpu_custom_call.1} parent=1 // pred_region
      %s1399 = ssub.s32 256, 256
      %1400 = vsyncadd [#allocation4], %s1399
      %s1401 = sshll.u32 [#allocation7], 4
      %s1402 = int_to_ptr.vmem [resolvable:$true] %s1401
      %1407 = dma.vmem_to_hbm [thread:$0]  %s1402, 256, %s5, [#allocation4], 128, 128, 8
    $region33: #{tpu_custom_call.1} parent=1 // pred_fallthru
      _
    // Predicated region
    $region34: #{tpu_custom_call.1} parent=1 // pred_check
      _
    $region35: #{tpu_custom_call.1} parent=1 // pred_check_branch
      %1409 = sbr.rel (0) target = $region37
    $region36: #{tpu_custom_call.1} parent=1 // pred_region
      %1410 = dma.done [#allocation4], 256
    $region37: #{tpu_custom_call.1} parent=1 // pred_fallthru
      _
    %1411 = vsyncpa [#allocation3], 1
    %1412 = vsyncpa [#allocation6], 1
    %1413 = vsyncpa [#allocation4], 1

</llo_original>
